<compile_context>
chip_gen: v7x
topology: tpu7x:2x2x1
jax: 0.10.0
libtpu: 0.0.40
codegen_flags: <defaults>
</compile_context>

<pallas_src>
import math
import functools

import jax
import jax.numpy as jnp
from jax.experimental import pallas as pl
from jax.experimental.pallas import tpu as pltpu


# ---------------------------------------------------------------------------
# Fused kernel: AdaLN1 -> MHA -> +residual -> AdaLN2 -> MLP -> +residual for a
# tile of `spt` whole sequences.
# ---------------------------------------------------------------------------
def _block_adaln_kernel(x_ref, gb_ref, wqkv_ref, *rest,
                        num_heads, head_dim, scale, eps, qkv_bias):
    if qkv_bias:
        (bqkv_ref, wproj_ref, bproj_ref, wfc1_ref, bfc1_ref,
         wfc2_ref, bfc2_ref, o_ref) = rest
    else:
        bqkv_ref = None
        (wproj_ref, bproj_ref, wfc1_ref, bfc1_ref,
         wfc2_ref, bfc2_ref, o_ref) = rest

    S, N, dim = x_ref.shape          # sequences-per-tile, seq len, model dim
    x = x_ref[...]                   # (S, N, dim) f32
    gb = gb_ref[...]                 # (S, 4*dim) f32 = [gamma1|beta1|gamma2|beta2]

    def adaln(xin, off):
        # AdaLayerNorm with PRE-COMPUTED gamma/beta rows (the img_feat
        # projection is a hoisted XLA GEMM). torch .std() is unbiased (ddof=1)
        # and eps is added to std (not inside the sqrt) -- matches the module.
        gamma = gb[:, None, off:off + dim]               # (S, 1, dim)
        beta = gb[:, None, off + dim:off + 2 * dim]
        mean = jnp.mean(xin, axis=-1, keepdims=True)
        diff = xin - mean
        var = jnp.sum(diff * diff, axis=-1, keepdims=True) * (1.0 / (dim - 1))
        inv = pl.reciprocal(jnp.sqrt(var) + eps, approx=True)   # EUP, not VALU
        return gamma * (diff * inv) + beta

    # ----------------- attention branch -----------------
    y = adaln(x, 0).reshape(S * N, dim).astype(jnp.bfloat16)
    qkv = jnp.dot(y, wqkv_ref[...],
                  preferred_element_type=jnp.float32)            # (S*N, 3*dim)
    if qkv_bias:
        qkv = qkv + bqkv_ref[...]

    qkv = qkv.astype(jnp.bfloat16)
    q3 = qkv[:, 0 * dim:1 * dim].reshape(S, N, dim)              # lane-aligned slices
    k3 = qkv[:, 1 * dim:2 * dim].reshape(S, N, dim)
    v3 = qkv[:, 2 * dim:3 * dim].reshape(S, N, dim)

    head_outs = []
    for h in range(num_heads):       # static loop; each head batched over S
        lo = h * head_dim
        hi = lo + head_dim
        s = jnp.einsum('snd,smd->snm', q3[:, :, lo:hi], k3[:, :, lo:hi],
                       preferred_element_type=jnp.float32) * scale   # (S, N, N)
        s = s - jnp.max(s, axis=-1, keepdims=True)
        p = jnp.exp(s)
        p = p * pl.reciprocal(jnp.sum(p, axis=-1, keepdims=True), approx=True)
        head_outs.append(
            jnp.einsum('snm,smd->snd', p.astype(jnp.bfloat16), v3[:, :, lo:hi],
                       preferred_element_type=jnp.float32))           # (S, N, hd)

    attn = jnp.concatenate(head_outs, axis=-1)                       # (S, N, dim)
    attn = attn.astype(jnp.bfloat16).reshape(S * N, dim)
    # ONE (S*N, dim) @ (dim, dim) projection over all heads.
    proj = jnp.dot(attn, wproj_ref[...],
                   preferred_element_type=jnp.float32) + bproj_ref[...]
    x1 = x + proj.reshape(S, N, dim)

    # ----------------- MLP branch -----------------
    y2 = adaln(x1, 2 * dim).reshape(S * N, dim).astype(jnp.bfloat16)
    h1 = jnp.dot(y2, wfc1_ref[...],
                 preferred_element_type=jnp.float32) + bfc1_ref[...]
    # TODO(synk): nn.GELU defaults to the exact erf formulation; the tanh
    # approximation is used (max abs deviation ~3e-3) since erf lowering is
    # not guaranteed in Mosaic.
    h1 = jax.nn.gelu(h1, approximate=True)
    h2 = jnp.dot(h1.astype(jnp.bfloat16), wfc2_ref[...],
                 preferred_element_type=jnp.float32) + bfc2_ref[...]
    o_ref[...] = (x1 + h2.reshape(S, N, dim)).astype(o_ref.dtype)


# ---------------------------------------------------------------------------
# Wrapper: hoisted gamma/beta GEMM + single fused pallas_call for the block.
# ---------------------------------------------------------------------------
@functools.partial(jax.jit, static_argnames=("num_heads", "eps", "qkv_bias"))
def block_adaln_forward(x, img_feat, params, *, num_heads, eps, qkv_bias):
    B, N, dim = x.shape
    head_dim = dim // num_heads
    hidden = params["w_fc1"].shape[1]
    p = params

    # Hoisted AdaLN gamma/beta projections (both norms fused): one
    # (B, 2048) @ (2048, 4*dim) XLA GEMM -- near-peak MXU, and keeps the
    # 2048-deep weights out of kernel VMEM entirely.
    gb = jnp.dot(img_feat.astype(jnp.bfloat16), p["w_gb"],
                 preferred_element_type=jnp.float32) + p["b_gb"]     # (B, 4*dim) f32

    # Rows per grid step: whole sequences, targeting >=256 rows so every GEMM
    # has a healthy M.  The (spt, 4*dim) gb block must either span all of B or
    # be sublane-aligned (multiple of 8 sequences).
    spt = B
    for cand in range(min(B, max(1, 256 // N)), 0, -1):
        if B % cand == 0 and (cand == B or cand % 8 == 0):
            spt = cand
            break

    kernel = functools.partial(
        _block_adaln_kernel, num_heads=num_heads, head_dim=head_dim,
        scale=float(head_dim) ** -0.5, eps=eps, qkv_bias=qkv_bias)

    def resident(a):
        # Full-array block, constant index -> DMA'd once, stays in VMEM.
        # TODO(synk): at scaled-up dims on v7x (64 MiB VMEM), switch these to
        # single-buffered specs or K-tile fc1/fc2 with a VMEM accumulator.
        return pl.BlockSpec(a.shape, lambda t: (0, 0))

    in_specs = [
        pl.BlockSpec((spt, N, dim), lambda t: (t, 0, 0)),   # x row tile
        pl.BlockSpec((spt, 4 * dim), lambda t: (t, 0)),     # per-seq gamma/beta rows
        resident(p["w_qkv"]),
    ]
    args = [x, gb, p["w_qkv"]]
    if qkv_bias:
        in_specs.append(resident(p["b_qkv"]))
        args.append(p["b_qkv"])
    for name in ("w_proj", "b_proj", "w_fc1", "b_fc1", "w_fc2", "b_fc2"):
        in_specs.append(resident(p[name]))
        args.append(p[name])

    weight_bytes = sum(int(a.size) * a.dtype.itemsize for a in args[2:])
    flops = (2 * B * N * dim * 3 * dim                 # qkv
             + 4 * B * num_heads * N * N * head_dim    # q@k^T + p@v
             + 2 * B * N * dim * dim                   # output projection
             + 4 * B * N * dim * hidden)               # fc1 + fc2
    cost = pl.CostEstimate(
        flops=int(flops),
        transcendentals=int(B * num_heads * N * N + B * N * hidden),
        bytes_accessed=int(2 * x.size * x.dtype.itemsize + 4 * gb.size
                           + weight_bytes))

    return pl.pallas_call(
        kernel,
        out_shape=jax.ShapeDtypeStruct((B, N, dim), x.dtype),
        grid=(B // spt,),
        in_specs=in_specs,
        out_specs=pl.BlockSpec((spt, N, dim), lambda t: (t, 0, 0)),
        compiler_params=pltpu.CompilerParams(
            dimension_semantics=("parallel",)),
        cost_estimate=cost,
    )(*args)


# ---------------------------------------------------------------------------
# Module: deterministic params (pre-transposed / fused at init) + forward.
# ---------------------------------------------------------------------------
class BlockAdaLN:
    FEAT_DIM = 2048  # AdaLayerNorm's mlp_gamma / mlp_beta input dim

    def __init__(self, dim, num_heads, mlp_ratio=4.0, qkv_bias=False,
                 eps=1e-6, *, key):
        assert dim % num_heads == 0
        self.dim = dim
        self.num_heads = num_heads
        self.qkv_bias = qkv_bias
        self.eps = eps
        hidden = int(dim * mlp_ratio)
        fd = self.FEAT_DIM

        def linear_init(k, fan_in, fan_out):
            # nn.Linear-style init; weight stored pre-transposed (in, out),
            # bias stored as a (1, out) row for lane-aligned broadcast.
            kw, kb = jax.random.split(k)
            bound = 1.0 / math.sqrt(fan_in)
            w = jax.random.uniform(kw, (fan_in, fan_out), jnp.float32, -bound, bound)
            b = jax.random.uniform(kb, (1, fan_out), jnp.float32, -bound, bound)
            return w, b

        ks = jax.random.split(key, 8)
        wg1, bg1 = linear_init(ks[0], fd, dim)       # norm1.mlp_gamma
        wb1, bb1 = linear_init(ks[1], fd, dim)       # norm1.mlp_beta
        wg2, bg2 = linear_init(ks[2], fd, dim)       # norm2.mlp_gamma
        wb2, bb2 = linear_init(ks[3], fd, dim)       # norm2.mlp_beta
        wqkv, bqkv = linear_init(ks[4], dim, 3 * dim)
        wproj, bproj = linear_init(ks[5], dim, dim)
        wfc1, bfc1 = linear_init(ks[6], dim, hidden)
        wfc2, bfc2 = linear_init(ks[7], hidden, dim)

        bf = jnp.bfloat16
        self.params = dict(
            # Both AdaLNs' gamma|beta heads fused into ONE (2048, 4*dim)
            # matrix, consumed by a hoisted XLA GEMM (not by the kernel).
            w_gb=jnp.concatenate([wg1, wb1, wg2, wb2], axis=1).astype(bf),
            b_gb=jnp.concatenate([bg1, bb1, bg2, bb2], axis=1),
            # Kernel-resident weights in bf16 (MXU-native, half the VMEM/DMA);
            # biases kept f32 and added onto the f32 accumulators.
            w_qkv=wqkv.astype(bf), b_qkv=bqkv,
            w_proj=wproj.astype(bf), b_proj=bproj,
            w_fc1=wfc1.astype(bf), b_fc1=bfc1,
            w_fc2=wfc2.astype(bf), b_fc2=bfc2,
        )

    def __call__(self, x, img_feat):
        return block_adaln_forward(x, img_feat, self.params,
                                   num_heads=self.num_heads, eps=self.eps,
                                   qkv_bias=self.qkv_bias)

    # Pure-JAX reference (mirrors the PyTorch forward, f32 math on the same
    # bf16-stored weights) for self-checking.
    def reference(self, x, img_feat):
        p = self.params
        D, H = self.dim, self.num_heads
        hd = D // H
        B, N, _ = x.shape
        f32 = jnp.float32
        gb = img_feat @ p["w_gb"].astype(f32) + p["b_gb"]          # (B, 4D)

        def adaln(xin, off):
            gamma = gb[:, None, off:off + D]
            beta = gb[:, None, off + D:off + 2 * D]
            mean = xin.mean(-1, keepdims=True)
            std = jnp.std(xin, axis=-1, keepdims=True, ddof=1)
            return gamma * (xin - mean) / (std + self.eps) + beta

        y = adaln(x, 0)
        qkv = y @ p["w_qkv"].astype(f32)
        if self.qkv_bias:
            qkv = qkv + p["b_qkv"]
        qkv = qkv.reshape(B, N, 3, H, hd).transpose(2, 0, 3, 1, 4)
        q, k, v = qkv[0], qkv[1], qkv[2]                           # (B, H, N, hd)
        attn = jax.nn.softmax(
            jnp.einsum("bhnd,bhmd->bhnm", q, k) * (hd ** -0.5), axis=-1)
        out = jnp.einsum("bhnm,bhmd->bhnd", attn, v)
        out = out.transpose(0, 2, 1, 3).reshape(B, N, D)
        x1 = x + (out @ p["w_proj"].astype(f32) + p["b_proj"])
        y2 = adaln(x1, 2 * D)
        h = jax.nn.gelu(y2 @ p["w_fc1"].astype(f32) + p["b_fc1"], approximate=True)
        return x1 + (h @ p["w_fc2"].astype(f32) + p["b_fc2"])


# ---------------------------------------------------------------------------
# Demo / self-check
# ---------------------------------------------------------------------------
if __name__ == "__main__":
    key = jax.random.PRNGKey(0)
    kx, kf, kp = jax.random.split(key, 3)

    batch, seq, dim, num_heads = 2, 8, 128, 4
    x = jax.random.normal(kx, (batch, seq, dim), jnp.float32)
    img_feat = jax.random.normal(kf, (batch, BlockAdaLN.FEAT_DIM), jnp.float32)

    model = BlockAdaLN(dim, num_heads, key=kp)
    out = jax.block_until_ready(model(x, img_feat))
    ref = model.reference(x, img_feat)

    ok = out.shape == (batch, seq, dim)
    # Kernel casts matmul inputs to bf16 (f32 accumulation); reference uses
    # f32 math on the same weights -> small, bounded drift.
    ok &= bool(jnp.allclose(out, ref, atol=5e-2, rtol=5e-2))

    print("KERNEL_OK" if ok else "KERNEL_MISMATCH")
</pallas_src>

<mosaic_0001>
module attributes {stable_mosaic.version = 11 : i64} {
  func.func @_block_adaln_kernel(%arg0: i32, %arg1: memref<2x8x128xf32, #tpu.memory_space<vmem>>, %arg2: memref<2x512xf32, #tpu.memory_space<vmem>>, %arg3: memref<128x384xbf16, #tpu.memory_space<vmem>>, %arg4: memref<128x128xbf16, #tpu.memory_space<vmem>>, %arg5: memref<1x128xf32, #tpu.memory_space<vmem>>, %arg6: memref<128x512xbf16, #tpu.memory_space<vmem>>, %arg7: memref<1x512xf32, #tpu.memory_space<vmem>>, %arg8: memref<512x128xbf16, #tpu.memory_space<vmem>>, %arg9: memref<1x128xf32, #tpu.memory_space<vmem>>, %arg10: memref<2x8x128xf32, #tpu.memory_space<vmem>>) attributes {dimension_semantics = [#tpu.dimension_semantics<parallel>], iteration_bounds = array<i64: 1>, scalar_prefetch = 0 : i64, scratch_operands = 0 : i64, tpu.core_type = #tpu.core_type<tc>, window_params = [{transform_indices = @transform_0, window_bounds = array<i64: 2, 8, 128>}, {transform_indices = @transform_1, window_bounds = array<i64: 2, 512>}, {pipeline_mode = #tpu.pipeline_mode<synchronous>, transform_indices = @transform_2, window_bounds = array<i64: 128, 384>}, {pipeline_mode = #tpu.pipeline_mode<synchronous>, transform_indices = @transform_3, window_bounds = array<i64: 128, 128>}, {pipeline_mode = #tpu.pipeline_mode<synchronous>, transform_indices = @transform_4, window_bounds = array<i64: 1, 128>}, {pipeline_mode = #tpu.pipeline_mode<synchronous>, transform_indices = @transform_5, window_bounds = array<i64: 128, 512>}, {pipeline_mode = #tpu.pipeline_mode<synchronous>, transform_indices = @transform_6, window_bounds = array<i64: 1, 512>}, {pipeline_mode = #tpu.pipeline_mode<synchronous>, transform_indices = @transform_7, window_bounds = array<i64: 512, 128>}, {pipeline_mode = #tpu.pipeline_mode<synchronous>, transform_indices = @transform_8, window_bounds = array<i64: 1, 128>}, {transform_indices = @transform_9, window_bounds = array<i64: 2, 8, 128>}]} {
    %c0 = arith.constant 0 : index
    %c0_0 = arith.constant 0 : index
    %c0_1 = arith.constant 0 : index
    %0 = vector.load %arg1[%c0, %c0_0, %c0_1] : memref<2x8x128xf32, #tpu.memory_space<vmem>>, vector<2x8x128xf32>
    %c0_2 = arith.constant 0 : index
    %c0_3 = arith.constant 0 : index
    %1 = vector.load %arg2[%c0_2, %c0_3] : memref<2x512xf32, #tpu.memory_space<vmem>>, vector<2x512xf32>
    %2 = vector.extract_strided_slice %1 {offsets = [0, 0], sizes = [2, 128], strides = [1, 1]} : vector<2x512xf32> to vector<2x128xf32>
    %3 = vector.shape_cast %2 : vector<2x128xf32> to vector<2x1x128xf32>
    %4 = vector.extract_strided_slice %1 {offsets = [0, 128], sizes = [2, 128], strides = [1, 1]} : vector<2x512xf32> to vector<2x128xf32>
    %5 = vector.shape_cast %4 : vector<2x128xf32> to vector<2x1x128xf32>
    %cst = arith.constant dense<0.000000e+00> : vector<2x8xf32>
    %6 = vector.multi_reduction <add>, %0, %cst [2] : vector<2x8x128xf32> to vector<2x8xf32>
    %7 = vector.shape_cast %6 : vector<2x8xf32> to vector<2x8x1xf32>
    %cst_4 = arith.constant 1.280000e+02 : f32
    %8 = vector.broadcast %cst_4 : f32 to vector<2x8x1xf32>
    %9 = arith.divf %7, %8 : vector<2x8x1xf32>
    %10 = vector.broadcast %9 : vector<2x8x1xf32> to vector<2x8x128xf32>
    %11 = arith.subf %0, %10 : vector<2x8x128xf32>
    %12 = arith.mulf %11, %11 : vector<2x8x128xf32>
    %cst_5 = arith.constant dense<0.000000e+00> : vector<2x8xf32>
    %13 = vector.multi_reduction <add>, %12, %cst_5 [2] : vector<2x8x128xf32> to vector<2x8xf32>
    %14 = vector.shape_cast %13 : vector<2x8xf32> to vector<2x8x1xf32>
    %cst_6 = arith.constant 0.00787401571 : f32
    %15 = vector.broadcast %cst_6 : f32 to vector<2x8x1xf32>
    %16 = arith.mulf %14, %15 : vector<2x8x1xf32>
    %17 = math.sqrt %16 : vector<2x8x1xf32>
    %cst_7 = arith.constant 9.99999997E-7 : f32
    %18 = vector.broadcast %cst_7 : f32 to vector<2x8x1xf32>
    %19 = arith.addf %17, %18 : vector<2x8x1xf32>
    %20 = tpu.reciprocal %19 {approx = true} : vector<2x8x1xf32> -> vector<2x8x1xf32>
    %21 = vector.broadcast %20 : vector<2x8x1xf32> to vector<2x8x128xf32>
    %22 = arith.mulf %11, %21 : vector<2x8x128xf32>
    %23 = vector.broadcast %3 : vector<2x1x128xf32> to vector<2x8x128xf32>
    %24 = arith.mulf %23, %22 : vector<2x8x128xf32>
    %25 = vector.broadcast %5 : vector<2x1x128xf32> to vector<2x8x128xf32>
    %26 = arith.addf %24, %25 : vector<2x8x128xf32>
    %27 = vector.shape_cast %26 : vector<2x8x128xf32> to vector<16x128xf32>
    %28 = arith.truncf %27 : vector<16x128xf32> to vector<16x128xbf16>
    %c0_8 = arith.constant 0 : index
    %c0_9 = arith.constant 0 : index
    %29 = vector.load %arg3[%c0_8, %c0_9] : memref<128x384xbf16, #tpu.memory_space<vmem>>, vector<128x384xbf16>
    %cst_10 = arith.constant dense<0.000000e+00> : vector<16x384xf32>
    %30 = tpu.matmul %28, %29, %cst_10 {dimension_numbers = #tpu.dot_dimension_numbers<[1], [0], [0], [1], [0, 0, 1, 1], [], []>} : vector<16x128xbf16>, vector<128x384xbf16>, vector<16x384xf32> -> vector<16x384xf32>
    %31 = arith.truncf %30 : vector<16x384xf32> to vector<16x384xbf16>
    %32 = vector.extract_strided_slice %31 {offsets = [0, 0], sizes = [16, 128], strides = [1, 1]} : vector<16x384xbf16> to vector<16x128xbf16>
    %33 = vector.shape_cast %32 : vector<16x128xbf16> to vector<2x8x128xbf16>
    %34 = vector.extract_strided_slice %31 {offsets = [0, 128], sizes = [16, 128], strides = [1, 1]} : vector<16x384xbf16> to vector<16x128xbf16>
    %35 = vector.shape_cast %34 : vector<16x128xbf16> to vector<2x8x128xbf16>
    %36 = vector.extract_strided_slice %31 {offsets = [0, 256], sizes = [16, 128], strides = [1, 1]} : vector<16x384xbf16> to vector<16x128xbf16>
    %37 = vector.shape_cast %36 : vector<16x128xbf16> to vector<2x8x128xbf16>
    %38 = vector.extract_strided_slice %33 {offsets = [0, 0, 0], sizes = [2, 8, 32], strides = [1, 1, 1]} : vector<2x8x128xbf16> to vector<2x8x32xbf16>
    %39 = vector.extract_strided_slice %35 {offsets = [0, 0, 0], sizes = [2, 8, 32], strides = [1, 1, 1]} : vector<2x8x128xbf16> to vector<2x8x32xbf16>
    "tpu.trace_start"() <{level = 10 : i32, message = "snd,smd->snm"}> : () -> ()
    %cst_11 = arith.constant dense<0.000000e+00> : vector<2x8x8xf32>
    %40 = tpu.matmul %38, %39, %cst_11 {dimension_numbers = #tpu.dot_dimension_numbers<[2], [2], [1], [1], [0, 0, 0, 1, 1, 1], [0], [0]>} : vector<2x8x32xbf16>, vector<2x8x32xbf16>, vector<2x8x8xf32> -> vector<2x8x8xf32>
    "tpu.trace_stop"() : () -> ()
    %cst_12 = arith.constant 0.176776692 : f32
    %41 = vector.broadcast %cst_12 : f32 to vector<2x8x8xf32>
    %42 = arith.mulf %40, %41 : vector<2x8x8xf32>
    %cst_13 = arith.constant dense<0xFF800000> : vector<2x8xf32>
    %43 = vector.multi_reduction <maximumf>, %42, %cst_13 [2] : vector<2x8x8xf32> to vector<2x8xf32>
    %44 = vector.shape_cast %43 : vector<2x8xf32> to vector<2x8x1xf32>
    %45 = vector.broadcast %44 : vector<2x8x1xf32> to vector<2x8x8xf32>
    %46 = arith.subf %42, %45 : vector<2x8x8xf32>
    %47 = math.exp %46 : vector<2x8x8xf32>
    %cst_14 = arith.constant dense<0.000000e+00> : vector<2x8xf32>
    %48 = vector.multi_reduction <add>, %47, %cst_14 [2] : vector<2x8x8xf32> to vector<2x8xf32>
    %49 = vector.shape_cast %48 : vector<2x8xf32> to vector<2x8x1xf32>
    %50 = tpu.reciprocal %49 {approx = true} : vector<2x8x1xf32> -> vector<2x8x1xf32>
    %51 = vector.broadcast %50 : vector<2x8x1xf32> to vector<2x8x8xf32>
    %52 = arith.mulf %47, %51 : vector<2x8x8xf32>
    %53 = arith.truncf %52 : vector<2x8x8xf32> to vector<2x8x8xbf16>
    %54 = vector.extract_strided_slice %37 {offsets = [0, 0, 0], sizes = [2, 8, 32], strides = [1, 1, 1]} : vector<2x8x128xbf16> to vector<2x8x32xbf16>
    "tpu.trace_start"() <{level = 10 : i32, message = "snm,smd->snd"}> : () -> ()
    %cst_15 = arith.constant dense<0.000000e+00> : vector<2x8x32xf32>
    %55 = tpu.matmul %53, %54, %cst_15 {dimension_numbers = #tpu.dot_dimension_numbers<[2], [1], [1], [2], [0, 0, 0, 1, 1, 2], [0], [0]>} : vector<2x8x8xbf16>, vector<2x8x32xbf16>, vector<2x8x32xf32> -> vector<2x8x32xf32>
    "tpu.trace_stop"() : () -> ()
    %56 = vector.extract_strided_slice %33 {offsets = [0, 0, 32], sizes = [2, 8, 32], strides = [1, 1, 1]} : vector<2x8x128xbf16> to vector<2x8x32xbf16>
    %57 = vector.extract_strided_slice %35 {offsets = [0, 0, 32], sizes = [2, 8, 32], strides = [1, 1, 1]} : vector<2x8x128xbf16> to vector<2x8x32xbf16>
    "tpu.trace_start"() <{level = 10 : i32, message = "snd,smd->snm"}> : () -> ()
    %cst_16 = arith.constant dense<0.000000e+00> : vector<2x8x8xf32>
    %58 = tpu.matmul %56, %57, %cst_16 {dimension_numbers = #tpu.dot_dimension_numbers<[2], [2], [1], [1], [0, 0, 0, 1, 1, 1], [0], [0]>} : vector<2x8x32xbf16>, vector<2x8x32xbf16>, vector<2x8x8xf32> -> vector<2x8x8xf32>
    "tpu.trace_stop"() : () -> ()
    %cst_17 = arith.constant 0.176776692 : f32
    %59 = vector.broadcast %cst_17 : f32 to vector<2x8x8xf32>
    %60 = arith.mulf %58, %59 : vector<2x8x8xf32>
    %cst_18 = arith.constant dense<0xFF800000> : vector<2x8xf32>
    %61 = vector.multi_reduction <maximumf>, %60, %cst_18 [2] : vector<2x8x8xf32> to vector<2x8xf32>
    %62 = vector.shape_cast %61 : vector<2x8xf32> to vector<2x8x1xf32>
    %63 = vector.broadcast %62 : vector<2x8x1xf32> to vector<2x8x8xf32>
    %64 = arith.subf %60, %63 : vector<2x8x8xf32>
    %65 = math.exp %64 : vector<2x8x8xf32>
    %cst_19 = arith.constant dense<0.000000e+00> : vector<2x8xf32>
    %66 = vector.multi_reduction <add>, %65, %cst_19 [2] : vector<2x8x8xf32> to vector<2x8xf32>
    %67 = vector.shape_cast %66 : vector<2x8xf32> to vector<2x8x1xf32>
    %68 = tpu.reciprocal %67 {approx = true} : vector<2x8x1xf32> -> vector<2x8x1xf32>
    %69 = vector.broadcast %68 : vector<2x8x1xf32> to vector<2x8x8xf32>
    %70 = arith.mulf %65, %69 : vector<2x8x8xf32>
    %71 = arith.truncf %70 : vector<2x8x8xf32> to vector<2x8x8xbf16>
    %72 = vector.extract_strided_slice %37 {offsets = [0, 0, 32], sizes = [2, 8, 32], strides = [1, 1, 1]} : vector<2x8x128xbf16> to vector<2x8x32xbf16>
    "tpu.trace_start"() <{level = 10 : i32, message = "snm,smd->snd"}> : () -> ()
    %cst_20 = arith.constant dense<0.000000e+00> : vector<2x8x32xf32>
    %73 = tpu.matmul %71, %72, %cst_20 {dimension_numbers = #tpu.dot_dimension_numbers<[2], [1], [1], [2], [0, 0, 0, 1, 1, 2], [0], [0]>} : vector<2x8x8xbf16>, vector<2x8x32xbf16>, vector<2x8x32xf32> -> vector<2x8x32xf32>
    "tpu.trace_stop"() : () -> ()
    %74 = vector.extract_strided_slice %33 {offsets = [0, 0, 64], sizes = [2, 8, 32], strides = [1, 1, 1]} : vector<2x8x128xbf16> to vector<2x8x32xbf16>
    %75 = vector.extract_strided_slice %35 {offsets = [0, 0, 64], sizes = [2, 8, 32], strides = [1, 1, 1]} : vector<2x8x128xbf16> to vector<2x8x32xbf16>
    "tpu.trace_start"() <{level = 10 : i32, message = "snd,smd->snm"}> : () -> ()
    %cst_21 = arith.constant dense<0.000000e+00> : vector<2x8x8xf32>
    %76 = tpu.matmul %74, %75, %cst_21 {dimension_numbers = #tpu.dot_dimension_numbers<[2], [2], [1], [1], [0, 0, 0, 1, 1, 1], [0], [0]>} : vector<2x8x32xbf16>, vector<2x8x32xbf16>, vector<2x8x8xf32> -> vector<2x8x8xf32>
    "tpu.trace_stop"() : () -> ()
    %cst_22 = arith.constant 0.176776692 : f32
    %77 = vector.broadcast %cst_22 : f32 to vector<2x8x8xf32>
    %78 = arith.mulf %76, %77 : vector<2x8x8xf32>
    %cst_23 = arith.constant dense<0xFF800000> : vector<2x8xf32>
    %79 = vector.multi_reduction <maximumf>, %78, %cst_23 [2] : vector<2x8x8xf32> to vector<2x8xf32>
    %80 = vector.shape_cast %79 : vector<2x8xf32> to vector<2x8x1xf32>
    %81 = vector.broadcast %80 : vector<2x8x1xf32> to vector<2x8x8xf32>
    %82 = arith.subf %78, %81 : vector<2x8x8xf32>
    %83 = math.exp %82 : vector<2x8x8xf32>
    %cst_24 = arith.constant dense<0.000000e+00> : vector<2x8xf32>
    %84 = vector.multi_reduction <add>, %83, %cst_24 [2] : vector<2x8x8xf32> to vector<2x8xf32>
    %85 = vector.shape_cast %84 : vector<2x8xf32> to vector<2x8x1xf32>
    %86 = tpu.reciprocal %85 {approx = true} : vector<2x8x1xf32> -> vector<2x8x1xf32>
    %87 = vector.broadcast %86 : vector<2x8x1xf32> to vector<2x8x8xf32>
    %88 = arith.mulf %83, %87 : vector<2x8x8xf32>
    %89 = arith.truncf %88 : vector<2x8x8xf32> to vector<2x8x8xbf16>
    %90 = vector.extract_strided_slice %37 {offsets = [0, 0, 64], sizes = [2, 8, 32], strides = [1, 1, 1]} : vector<2x8x128xbf16> to vector<2x8x32xbf16>
    "tpu.trace_start"() <{level = 10 : i32, message = "snm,smd->snd"}> : () -> ()
    %cst_25 = arith.constant dense<0.000000e+00> : vector<2x8x32xf32>
    %91 = tpu.matmul %89, %90, %cst_25 {dimension_numbers = #tpu.dot_dimension_numbers<[2], [1], [1], [2], [0, 0, 0, 1, 1, 2], [0], [0]>} : vector<2x8x8xbf16>, vector<2x8x32xbf16>, vector<2x8x32xf32> -> vector<2x8x32xf32>
    "tpu.trace_stop"() : () -> ()
    %92 = vector.extract_strided_slice %33 {offsets = [0, 0, 96], sizes = [2, 8, 32], strides = [1, 1, 1]} : vector<2x8x128xbf16> to vector<2x8x32xbf16>
    %93 = vector.extract_strided_slice %35 {offsets = [0, 0, 96], sizes = [2, 8, 32], strides = [1, 1, 1]} : vector<2x8x128xbf16> to vector<2x8x32xbf16>
    "tpu.trace_start"() <{level = 10 : i32, message = "snd,smd->snm"}> : () -> ()
    %cst_26 = arith.constant dense<0.000000e+00> : vector<2x8x8xf32>
    %94 = tpu.matmul %92, %93, %cst_26 {dimension_numbers = #tpu.dot_dimension_numbers<[2], [2], [1], [1], [0, 0, 0, 1, 1, 1], [0], [0]>} : vector<2x8x32xbf16>, vector<2x8x32xbf16>, vector<2x8x8xf32> -> vector<2x8x8xf32>
    "tpu.trace_stop"() : () -> ()
    %cst_27 = arith.constant 0.176776692 : f32
    %95 = vector.broadcast %cst_27 : f32 to vector<2x8x8xf32>
    %96 = arith.mulf %94, %95 : vector<2x8x8xf32>
    %cst_28 = arith.constant dense<0xFF800000> : vector<2x8xf32>
    %97 = vector.multi_reduction <maximumf>, %96, %cst_28 [2] : vector<2x8x8xf32> to vector<2x8xf32>
    %98 = vector.shape_cast %97 : vector<2x8xf32> to vector<2x8x1xf32>
    %99 = vector.broadcast %98 : vector<2x8x1xf32> to vector<2x8x8xf32>
    %100 = arith.subf %96, %99 : vector<2x8x8xf32>
    %101 = math.exp %100 : vector<2x8x8xf32>
    %cst_29 = arith.constant dense<0.000000e+00> : vector<2x8xf32>
    %102 = vector.multi_reduction <add>, %101, %cst_29 [2] : vector<2x8x8xf32> to vector<2x8xf32>
    %103 = vector.shape_cast %102 : vector<2x8xf32> to vector<2x8x1xf32>
    %104 = tpu.reciprocal %103 {approx = true} : vector<2x8x1xf32> -> vector<2x8x1xf32>
    %105 = vector.broadcast %104 : vector<2x8x1xf32> to vector<2x8x8xf32>
    %106 = arith.mulf %101, %105 : vector<2x8x8xf32>
    %107 = arith.truncf %106 : vector<2x8x8xf32> to vector<2x8x8xbf16>
    %108 = vector.extract_strided_slice %37 {offsets = [0, 0, 96], sizes = [2, 8, 32], strides = [1, 1, 1]} : vector<2x8x128xbf16> to vector<2x8x32xbf16>
    "tpu.trace_start"() <{level = 10 : i32, message = "snm,smd->snd"}> : () -> ()
    %cst_30 = arith.constant dense<0.000000e+00> : vector<2x8x32xf32>
    %109 = tpu.matmul %107, %108, %cst_30 {dimension_numbers = #tpu.dot_dimension_numbers<[2], [1], [1], [2], [0, 0, 0, 1, 1, 2], [0], [0]>} : vector<2x8x8xbf16>, vector<2x8x32xbf16>, vector<2x8x32xf32> -> vector<2x8x32xf32>
    "tpu.trace_stop"() : () -> ()
    %110 = tpu.concatenate %55, %73, %91, %109 in 2 : vector<2x8x32xf32>, vector<2x8x32xf32>, vector<2x8x32xf32>, vector<2x8x32xf32> -> vector<2x8x128xf32>
    %111 = arith.truncf %110 : vector<2x8x128xf32> to vector<2x8x128xbf16>
    %112 = vector.shape_cast %111 : vector<2x8x128xbf16> to vector<16x128xbf16>
    %c0_31 = arith.constant 0 : index
    %c0_32 = arith.constant 0 : index
    %113 = vector.load %arg4[%c0_31, %c0_32] : memref<128x128xbf16, #tpu.memory_space<vmem>>, vector<128x128xbf16>
    %cst_33 = arith.constant dense<0.000000e+00> : vector<16x128xf32>
    %114 = tpu.matmul %112, %113, %cst_33 {dimension_numbers = #tpu.dot_dimension_numbers<[1], [0], [0], [1], [0, 0, 1, 1], [], []>} : vector<16x128xbf16>, vector<128x128xbf16>, vector<16x128xf32> -> vector<16x128xf32>
    %c0_34 = arith.constant 0 : index
    %c0_35 = arith.constant 0 : index
    %115 = vector.load %arg5[%c0_34, %c0_35] : memref<1x128xf32, #tpu.memory_space<vmem>>, vector<1x128xf32>
    %116 = vector.broadcast %115 : vector<1x128xf32> to vector<16x128xf32>
    %117 = arith.addf %114, %116 : vector<16x128xf32>
    %118 = vector.shape_cast %117 : vector<16x128xf32> to vector<2x8x128xf32>
    %119 = arith.addf %0, %118 : vector<2x8x128xf32>
    %120 = vector.extract_strided_slice %1 {offsets = [0, 256], sizes = [2, 128], strides = [1, 1]} : vector<2x512xf32> to vector<2x128xf32>
    %121 = vector.shape_cast %120 : vector<2x128xf32> to vector<2x1x128xf32>
    %122 = vector.extract_strided_slice %1 {offsets = [0, 384], sizes = [2, 128], strides = [1, 1]} : vector<2x512xf32> to vector<2x128xf32>
    %123 = vector.shape_cast %122 : vector<2x128xf32> to vector<2x1x128xf32>
    %cst_36 = arith.constant dense<0.000000e+00> : vector<2x8xf32>
    %124 = vector.multi_reduction <add>, %119, %cst_36 [2] : vector<2x8x128xf32> to vector<2x8xf32>
    %125 = vector.shape_cast %124 : vector<2x8xf32> to vector<2x8x1xf32>
    %cst_37 = arith.constant 1.280000e+02 : f32
    %126 = vector.broadcast %cst_37 : f32 to vector<2x8x1xf32>
    %127 = arith.divf %125, %126 : vector<2x8x1xf32>
    %128 = vector.broadcast %127 : vector<2x8x1xf32> to vector<2x8x128xf32>
    %129 = arith.subf %119, %128 : vector<2x8x128xf32>
    %130 = arith.mulf %129, %129 : vector<2x8x128xf32>
    %cst_38 = arith.constant dense<0.000000e+00> : vector<2x8xf32>
    %131 = vector.multi_reduction <add>, %130, %cst_38 [2] : vector<2x8x128xf32> to vector<2x8xf32>
    %132 = vector.shape_cast %131 : vector<2x8xf32> to vector<2x8x1xf32>
    %cst_39 = arith.constant 0.00787401571 : f32
    %133 = vector.broadcast %cst_39 : f32 to vector<2x8x1xf32>
    %134 = arith.mulf %132, %133 : vector<2x8x1xf32>
    %135 = math.sqrt %134 : vector<2x8x1xf32>
    %cst_40 = arith.constant 9.99999997E-7 : f32
    %136 = vector.broadcast %cst_40 : f32 to vector<2x8x1xf32>
    %137 = arith.addf %135, %136 : vector<2x8x1xf32>
    %138 = tpu.reciprocal %137 {approx = true} : vector<2x8x1xf32> -> vector<2x8x1xf32>
    %139 = vector.broadcast %138 : vector<2x8x1xf32> to vector<2x8x128xf32>
    %140 = arith.mulf %129, %139 : vector<2x8x128xf32>
    %141 = vector.broadcast %121 : vector<2x1x128xf32> to vector<2x8x128xf32>
    %142 = arith.mulf %141, %140 : vector<2x8x128xf32>
    %143 = vector.broadcast %123 : vector<2x1x128xf32> to vector<2x8x128xf32>
    %144 = arith.addf %142, %143 : vector<2x8x128xf32>
    %145 = vector.shape_cast %144 : vector<2x8x128xf32> to vector<16x128xf32>
    %146 = arith.truncf %145 : vector<16x128xf32> to vector<16x128xbf16>
    %c0_41 = arith.constant 0 : index
    %c0_42 = arith.constant 0 : index
    %147 = vector.load %arg6[%c0_41, %c0_42] : memref<128x512xbf16, #tpu.memory_space<vmem>>, vector<128x512xbf16>
    %cst_43 = arith.constant dense<0.000000e+00> : vector<16x512xf32>
    %148 = tpu.matmul %146, %147, %cst_43 {dimension_numbers = #tpu.dot_dimension_numbers<[1], [0], [0], [1], [0, 0, 1, 1], [], []>} : vector<16x128xbf16>, vector<128x512xbf16>, vector<16x512xf32> -> vector<16x512xf32>
    %c0_44 = arith.constant 0 : index
    %c0_45 = arith.constant 0 : index
    %149 = vector.load %arg7[%c0_44, %c0_45] : memref<1x512xf32, #tpu.memory_space<vmem>>, vector<1x512xf32>
    %150 = vector.broadcast %149 : vector<1x512xf32> to vector<16x512xf32>
    %151 = arith.addf %148, %150 : vector<16x512xf32>
    %152 = arith.mulf %151, %151 : vector<16x512xf32>
    %153 = arith.mulf %151, %152 : vector<16x512xf32>
    %cst_46 = arith.constant 4.471500e-02 : f32
    %154 = vector.broadcast %cst_46 : f32 to vector<16x512xf32>
    %155 = arith.mulf %154, %153 : vector<16x512xf32>
    %156 = arith.addf %151, %155 : vector<16x512xf32>
    %cst_47 = arith.constant 0.797884583 : f32
    %157 = vector.broadcast %cst_47 : f32 to vector<16x512xf32>
    %158 = arith.mulf %157, %156 : vector<16x512xf32>
    %159 = math.tanh %158 : vector<16x512xf32>
    %cst_48 = arith.constant 1.000000e+00 : f32
    %160 = vector.broadcast %cst_48 : f32 to vector<16x512xf32>
    %161 = arith.addf %160, %159 : vector<16x512xf32>
    %cst_49 = arith.constant 5.000000e-01 : f32
    %162 = vector.broadcast %cst_49 : f32 to vector<16x512xf32>
    %163 = arith.mulf %162, %161 : vector<16x512xf32>
    %164 = arith.mulf %151, %163 : vector<16x512xf32>
    %165 = arith.truncf %164 : vector<16x512xf32> to vector<16x512xbf16>
    %c0_50 = arith.constant 0 : index
    %c0_51 = arith.constant 0 : index
    %166 = vector.load %arg8[%c0_50, %c0_51] : memref<512x128xbf16, #tpu.memory_space<vmem>>, vector<512x128xbf16>
    %cst_52 = arith.constant dense<0.000000e+00> : vector<16x128xf32>
    %167 = tpu.matmul %165, %166, %cst_52 {dimension_numbers = #tpu.dot_dimension_numbers<[1], [0], [0], [1], [0, 0, 1, 1], [], []>} : vector<16x512xbf16>, vector<512x128xbf16>, vector<16x128xf32> -> vector<16x128xf32>
    %c0_53 = arith.constant 0 : index
    %c0_54 = arith.constant 0 : index
    %168 = vector.load %arg9[%c0_53, %c0_54] : memref<1x128xf32, #tpu.memory_space<vmem>>, vector<1x128xf32>
    %169 = vector.broadcast %168 : vector<1x128xf32> to vector<16x128xf32>
    %170 = arith.addf %167, %169 : vector<16x128xf32>
    %171 = vector.shape_cast %170 : vector<16x128xf32> to vector<2x8x128xf32>
    %172 = arith.addf %119, %171 : vector<2x8x128xf32>
    %c0_55 = arith.constant 0 : index
    %c0_56 = arith.constant 0 : index
    %c0_57 = arith.constant 0 : index
    %173 = vector.load %arg10[%c0_55, %c0_56, %c0_57] : memref<2x8x128xf32, #tpu.memory_space<vmem>>, vector<2x8x128xf32>
    tpu.vector_store %arg10[%c0_55, %c0_56, %c0_57], %172 {strides = array<i32>} : memref<2x8x128xf32, #tpu.memory_space<vmem>>, vector<2x8x128xf32>,
    return
  }
  func.func @transform_0(%arg0: i32) -> (i32, i32, i32) {
    %c0_i32 = arith.constant 0 : i32
    %c0_i32_0 = arith.constant 0 : i32
    %c0_i32_1 = arith.constant 0 : i32
    return %arg0, %c0_i32, %c0_i32_0 : i32, i32, i32
  }
  func.func @transform_1(%arg0: i32) -> (i32, i32) {
    %c0_i32 = arith.constant 0 : i32
    %c0_i32_0 = arith.constant 0 : i32
    return %arg0, %c0_i32 : i32, i32
  }
  func.func @transform_2(%arg0: i32) -> (i32, i32) {
    %c0_i32 = arith.constant 0 : i32
    %c0_i32_0 = arith.constant 0 : i32
    %c0_i32_1 = arith.constant 0 : i32
    return %c0_i32, %c0_i32_0 : i32, i32
  }
  func.func @transform_3(%arg0: i32) -> (i32, i32) {
    %c0_i32 = arith.constant 0 : i32
    %c0_i32_0 = arith.constant 0 : i32
    %c0_i32_1 = arith.constant 0 : i32
    return %c0_i32, %c0_i32_0 : i32, i32
  }
  func.func @transform_4(%arg0: i32) -> (i32, i32) {
    %c0_i32 = arith.constant 0 : i32
    %c0_i32_0 = arith.constant 0 : i32
    %c0_i32_1 = arith.constant 0 : i32
    return %c0_i32, %c0_i32_0 : i32, i32
  }
  func.func @transform_5(%arg0: i32) -> (i32, i32) {
    %c0_i32 = arith.constant 0 : i32
    %c0_i32_0 = arith.constant 0 : i32
    %c0_i32_1 = arith.constant 0 : i32
    return %c0_i32, %c0_i32_0 : i32, i32
  }
  func.func @transform_6(%arg0: i32) -> (i32, i32) {
    %c0_i32 = arith.constant 0 : i32
    %c0_i32_0 = arith.constant 0 : i32
    %c0_i32_1 = arith.constant 0 : i32
    return %c0_i32, %c0_i32_0 : i32, i32
  }
  func.func @transform_7(%arg0: i32) -> (i32, i32) {
    %c0_i32 = arith.constant 0 : i32
    %c0_i32_0 = arith.constant 0 : i32
    %c0_i32_1 = arith.constant 0 : i32
    return %c0_i32, %c0_i32_0 : i32, i32
  }
  func.func @transform_8(%arg0: i32) -> (i32, i32) {
    %c0_i32 = arith.constant 0 : i32
    %c0_i32_0 = arith.constant 0 : i32
    %c0_i32_1 = arith.constant 0 : i32
    return %c0_i32, %c0_i32_0 : i32, i32
  }
  func.func @transform_9(%arg0: i32) -> (i32, i32, i32) {
    %c0_i32 = arith.constant 0 : i32
    %c0_i32_0 = arith.constant 0 : i32
    %c0_i32_1 = arith.constant 0 : i32
    return %arg0, %c0_i32, %c0_i32_0 : i32, i32, i32
  }
}

</mosaic_0001>

<llo_original>
// kernel: block_adaln_forward.1
$region0: #{block_adaln_forward.1}
  #allocation0 [shape = 'u32[]', space=smem, size = 0x4, offset = 0x4, fixed_abs, tag = 'smem constant byte address 0x4 - core index']
  #allocation1 [shape = 'u32[144,128]{1,0:T(1,128)}', space=vmem, size = 0x12000, scoped, tag = 'internal scratch']
  %s0 = inlined_call_operand.vmem [shape: f32[2,8,128], index: 0, kind: input, shape index: {}]
  %s1 = inlined_call_operand.vmem [shape: f32[2,512], index: 1, kind: input, shape index: {}]
  %s2 = inlined_call_operand.vmem [shape: bf16[128,384], index: 2, kind: input, shape index: {}]
  %s3 = inlined_call_operand.vmem [shape: bf16[128,128], index: 3, kind: input, shape index: {}]
  %s4 = inlined_call_operand.vmem [shape: f32[1,128], index: 4, kind: input, shape index: {}]
  %s5 = inlined_call_operand.vmem [shape: bf16[128,512], index: 5, kind: input, shape index: {}]
  %s6 = inlined_call_operand.vmem [shape: f32[1,512], index: 6, kind: input, shape index: {}]
  %s7 = inlined_call_operand.vmem [shape: bf16[512,128], index: 7, kind: input, shape index: {}]
  %s8 = inlined_call_operand.vmem [shape: f32[1,128], index: 8, kind: input, shape index: {}]
  %s9 = inlined_call_operand.hbm [shape: f32[2,8,128], index: 9, kind: output, shape index: {}]
  %s10 = sld [smem:[#allocation0]]
  $region46: #{block_adaln_forward.1} parent=0
    _
  %s12 = ssub.s32 1, %s10
  %s13 = scalar_select 0, %s12, %s10
  $region1: #{block_adaln_forward.1} parent=0
    #allocation2 [shape = 'u8[8192]{0}', space=vmem, size = 0x2000, scoped, tag = 'output window, operand 0, single buffered']
    #allocation3 [shape = 's32[1]{0}', space=sflag, size = 0x4, scoped, tag = 'scoped memory for block_adaln_forward.1']
    %14 = vsyncpa [#allocation3], 0
    // Predicated region
    $region2: #{block_adaln_forward.1} parent=1 // pred_check
      _
    $region3: #{block_adaln_forward.1} parent=1 // pred_check_branch
      %16 = sbr.rel (0) target = $region5
    $region4: #{block_adaln_forward.1} parent=1 // pred_region
      _
    $region5: #{block_adaln_forward.1} parent=1 // pred_fallthru
      _
    // Predicated region
    $region6: #{block_adaln_forward.1} parent=1 // pred_check
      _
    $region7: #{block_adaln_forward.1} parent=1 // pred_check_branch
      %18 = sbr.rel (0) target = $region9
    $region8: #{block_adaln_forward.1} parent=1 // pred_region
      _
    $region9: #{block_adaln_forward.1} parent=1 // pred_fallthru
      _
    // Predicated region
    $region10: #{block_adaln_forward.1} parent=1 // pred_check
      _
    $region11: #{block_adaln_forward.1} parent=1 // pred_check_branch
      %20 = sbr.rel (0) target = $region13
    $region12: #{block_adaln_forward.1} parent=1 // pred_region
      _
    $region13: #{block_adaln_forward.1} parent=1 // pred_fallthru
      _
    // Predicated region
    $region14: #{block_adaln_forward.1} parent=1 // pred_check
      _
    $region15: #{block_adaln_forward.1} parent=1 // pred_check_branch
      %22 = sbr.rel (0) target = $region17
    $region16: #{block_adaln_forward.1} parent=1 // pred_region
      _
    $region17: #{block_adaln_forward.1} parent=1 // pred_fallthru
      _
    // Predicated region
    $region18: #{block_adaln_forward.1} parent=1 // pred_check
      _
    $region19: #{block_adaln_forward.1} parent=1 // pred_check_branch
      %24 = sbr.rel (0) target = $region21
    $region20: #{block_adaln_forward.1} parent=1 // pred_region
      _
    $region21: #{block_adaln_forward.1} parent=1 // pred_fallthru
      _
    // Predicated region
    $region22: #{block_adaln_forward.1} parent=1 // pred_check
      _
    $region23: #{block_adaln_forward.1} parent=1 // pred_check_branch
      %26 = sbr.rel (0) target = $region25
    $region24: #{block_adaln_forward.1} parent=1 // pred_region
      _
    $region25: #{block_adaln_forward.1} parent=1 // pred_fallthru
      _
    // Predicated region
    $region26: #{block_adaln_forward.1} parent=1 // pred_check
      _
    $region27: #{block_adaln_forward.1} parent=1 // pred_check_branch
      %28 = sbr.rel (0) target = $region29
    $region28: #{block_adaln_forward.1} parent=1 // pred_region
      _
    $region29: #{block_adaln_forward.1} parent=1 // pred_fallthru
      _
    // Predicated region
    $region30: #{block_adaln_forward.1} parent=1 // pred_check
      _
    $region31: #{block_adaln_forward.1} parent=1 // pred_check_branch
      %30 = sbr.rel (0) target = $region33
    $region32: #{block_adaln_forward.1} parent=1 // pred_region
      _
    $region33: #{block_adaln_forward.1} parent=1 // pred_fallthru
      _
    // Predicated region
    $region34: #{block_adaln_forward.1} parent=1 // pred_check
      _
    $region35: #{block_adaln_forward.1} parent=1 // pred_check_branch
      %32 = sbr.rel (0) target = $region37
    $region36: #{block_adaln_forward.1} parent=1 // pred_region
      _
    $region37: #{block_adaln_forward.1} parent=1 // pred_fallthru
      _
    %v34 = vld [vmem:[%s0] sm:$0xff]
    %v35 = vld [vmem:[%s0 + $0x8] sm:$0xff]
    %v36 = vld [vmem:[%s1] sm:$0xff]
    %v39 = vunpack.c.l.s4 1966171168
    %v40 = vunpack.c.0.s8 %v39
    %v41 = vlaneseq
    %v42 = vshrl.u32 %v41, 7
    %v43 = vsub.s32 %v40, %v42
    %v44 = vrot.slane %v36, %v43
    %v45 = vcombine.high %v44, %v44
    %v46 = vrot.slane %v44, 1
    %v47 = vrot.slane %v45, 1
    %48 = vadd.xlane.f32.xlu0 %v34
    %v49 = vpop.xlane.xlu0 %48
    %50 = vadd.xlane.f32.xlu0 %v35
    %v51 = vpop.xlane.xlu0 %50
    %v52 = vrcp.pop 128.0
    %v53 = vmul.f32 %v49, %v52
    %v54 = vmul.f32 %v51, %v52
    %v55 = vsub.f32 %v34, %v53
    %v56 = vsub.f32 %v35, %v54
    %v57 = vmul.f32 %v55, %v55
    %v58 = vmul.f32 %v56, %v56
    %59 = vadd.xlane.f32.xlu0 %v57
    %v60 = vpop.xlane.xlu0 %59
    %61 = vadd.xlane.f32.xlu0 %v58
    %v62 = vpop.xlane.xlu0 %61
    %v63 = vmul.f32 %v60, 0.007874016
    %v64 = vmul.f32 %v62, 0.007874016
    %v65 = vrsqrt.pop %v63
    %v66 = vmul.f32 %v63, %v65
    %vm67 = vcmp.eq.f32.partialorder %v63, inf
    %v68 = vsel %vm67, %v63, %v66
    %vm69 = vcmp.eq.f32.partialorder %v63, 0.0
    %v70 = vand.u32 %v63, 2147483648
    %v71 = vsel %vm69, %v70, %v68
    %v72 = vrsqrt.pop %v64
    %v73 = vmul.f32 %v64, %v72
    %vm74 = vcmp.eq.f32.partialorder %v64, inf
    %v75 = vsel %vm74, %v64, %v73
    %vm76 = vcmp.eq.f32.partialorder %v64, 0.0
    %v77 = vand.u32 %v64, 2147483648
    %v78 = vsel %vm76, %v77, %v75
    %v79 = vadd.f32 %v71, 1e-06
    %v80 = vadd.f32 %v78, 1e-06
    %v81 = vrcp.pop %v79
    %v82 = vrcp.pop %v80
    %v83 = vmul.f32 %v55, %v81
    %v84 = vmul.f32 %v56, %v82
    %v85 = vlaneseq
    %v86 = vshrl.u32 %v85, 7
    %v87 = vsub.s32 0, %v86
    %v88 = vrot.slane %v44, %v87
    %v89 = vlaneseq
    %v90 = vshrl.u32 %v89, 7
    %v91 = vsub.s32 0, %v90
    %v92 = vrot.slane %v45, %v91
    %v95 = vmul.f32 %v88, %v83
    %v96 = vmul.f32 %v92, %v84
    %v97 = vlaneseq
    %v98 = vshrl.u32 %v97, 7
    %v99 = vsub.s32 0, %v98
    %v100 = vrot.slane %v46, %v99
    %v101 = vlaneseq
    %v102 = vshrl.u32 %v101, 7
    %v103 = vsub.s32 0, %v102
    %v104 = vrot.slane %v47, %v103
    %v107 = vadd.f32 %v95, %v100
    %v108 = vadd.f32 %v96, %v104
    %v109 = vpack.c.bf16 %v108, %v107
    %v110 = vld [vmem:[%s2] sm:$0xff]
    %v111 = vld [vmem:[%s2 + $0x8] sm:$0xf]
    %v112 = vld [vmem:[%s2 + $0xc] sm:$0xff]
    %v113 = vld [vmem:[%s2 + $0x14] sm:$0xf]
    %v114 = vld [vmem:[%s2 + $0x18] sm:$0xff]
    %v115 = vld [vmem:[%s2 + $0x20] sm:$0xf]
    %v116 = vld [vmem:[%s2 + $0x24] sm:$0xff]
    %v117 = vld [vmem:[%s2 + $0x2c] sm:$0xf]
    %v118 = vld [vmem:[%s2 + $0x30] sm:$0xff]
    %v119 = vld [vmem:[%s2 + $0x38] sm:$0xf]
    %v120 = vld [vmem:[%s2 + $0x3c] sm:$0xff]
    %v121 = vld [vmem:[%s2 + $0x44] sm:$0xf]
    %v122 = vld [vmem:[%s2 + $0x48] sm:$0xff]
    %v123 = vld [vmem:[%s2 + $0x50] sm:$0xf]
    %v124 = vld [vmem:[%s2 + $0x54] sm:$0xff]
    %v125 = vld [vmem:[%s2 + $0x5c] sm:$0xf]
    %v126 = vld [vmem:[%s2 + $0x60] sm:$0xff]
    %v127 = vld [vmem:[%s2 + $0x68] sm:$0xf]
    %v128 = vld [vmem:[%s2 + $0x6c] sm:$0xff]
    %v129 = vld [vmem:[%s2 + $0x74] sm:$0xf]
    %v130 = vld [vmem:[%s2 + $0x78] sm:$0xff]
    %v131 = vld [vmem:[%s2 + $0x80] sm:$0xf]
    %v132 = vld [vmem:[%s2 + $0x84] sm:$0xff]
    %v133 = vld [vmem:[%s2 + $0x8c] sm:$0xf]
    %v134 = vld [vmem:[%s2 + $0x90] sm:$0xff]
    %v135 = vld [vmem:[%s2 + $0x98] sm:$0xf]
    %v136 = vld [vmem:[%s2 + $0x9c] sm:$0xff]
    %v137 = vld [vmem:[%s2 + $0xa4] sm:$0xf]
    %v138 = vld [vmem:[%s2 + $0xa8] sm:$0xff]
    %v139 = vld [vmem:[%s2 + $0xb0] sm:$0xf]
    %v140 = vld [vmem:[%s2 + $0xb4] sm:$0xff]
    %v141 = vld [vmem:[%s2 + $0xbc] sm:$0xf]
    %v174 = vunpack.c.l.b16 %v110
    %v175 = vunpack.c.h.b16 %v110
    %v176 = vunpack.c.l.b16 %v111
    %v177 = vunpack.c.l.b16 %v112
    %v178 = vunpack.c.h.b16 %v112
    %v179 = vunpack.c.l.b16 %v113
    %v180 = vunpack.c.l.b16 %v114
    %v181 = vunpack.c.h.b16 %v114
    %v182 = vunpack.c.l.b16 %v115
    %v183 = vunpack.c.l.b16 %v116
    %v184 = vunpack.c.h.b16 %v116
    %v185 = vunpack.c.l.b16 %v117
    %v186 = vunpack.c.l.b16 %v118
    %v187 = vunpack.c.h.b16 %v118
    %v188 = vunpack.c.l.b16 %v119
    %v189 = vunpack.c.l.b16 %v120
    %v190 = vunpack.c.h.b16 %v120
    %v191 = vunpack.c.l.b16 %v121
    %v192 = vunpack.c.l.b16 %v122
    %v193 = vunpack.c.h.b16 %v122
    %v194 = vunpack.c.l.b16 %v123
    %v195 = vunpack.c.l.b16 %v124
    %v196 = vunpack.c.h.b16 %v124
    %v197 = vunpack.c.l.b16 %v125
    %v198 = vunpack.c.l.b16 %v126
    %v199 = vunpack.c.h.b16 %v126
    %v200 = vunpack.c.l.b16 %v127
    %v201 = vunpack.c.l.b16 %v128
    %v202 = vunpack.c.h.b16 %v128
    %v203 = vunpack.c.l.b16 %v129
    %v204 = vunpack.c.l.b16 %v130
    %v205 = vunpack.c.h.b16 %v130
    %v206 = vunpack.c.l.b16 %v131
    %v207 = vunpack.c.l.b16 %v132
    %v208 = vunpack.c.h.b16 %v132
    %v209 = vunpack.c.l.b16 %v133
    %v210 = vunpack.c.l.b16 %v134
    %v211 = vunpack.c.h.b16 %v134
    %v212 = vunpack.c.l.b16 %v135
    %v213 = vunpack.c.l.b16 %v136
    %v214 = vunpack.c.h.b16 %v136
    %v215 = vunpack.c.l.b16 %v137
    %v216 = vunpack.c.l.b16 %v138
    %v217 = vunpack.c.h.b16 %v138
    %v218 = vunpack.c.l.b16 %v139
    %v219 = vunpack.c.l.b16 %v140
    %v220 = vunpack.c.h.b16 %v140
    %v221 = vunpack.c.l.b16 %v141
    %v222 = vpack.c.b16 %v177, %v174
    %v223 = vpack.c.b16 %v178, %v175
    %v224 = vpack.c.b16 %v179, %v176
    %v225 = vpack.c.b16 %v183, %v180
    %v226 = vpack.c.b16 %v184, %v181
    %v227 = vpack.c.b16 %v185, %v182
    %v228 = vpack.c.b16 %v189, %v186
    %v229 = vpack.c.b16 %v190, %v187
    %v230 = vpack.c.b16 %v191, %v188
    %v231 = vpack.c.b16 %v195, %v192
    %v232 = vpack.c.b16 %v196, %v193
    %v233 = vpack.c.b16 %v197, %v194
    %v234 = vpack.c.b16 %v201, %v198
    %v235 = vpack.c.b16 %v202, %v199
    %v236 = vpack.c.b16 %v203, %v200
    %v237 = vpack.c.b16 %v207, %v204
    %v238 = vpack.c.b16 %v208, %v205
    %v239 = vpack.c.b16 %v209, %v206
    %v240 = vpack.c.b16 %v213, %v210
    %v241 = vpack.c.b16 %v214, %v211
    %v242 = vpack.c.b16 %v215, %v212
    %v243 = vpack.c.b16 %v219, %v216
    %v244 = vpack.c.b16 %v220, %v217
    %v245 = vpack.c.b16 %v221, %v218
    %270 = vmatprep.subr.bf16.mxu0 %v223
    %271 = vmatpush1.bf16.msra.mxu0 %v222
    %272 = vmatprep.subr.bf16.mxu0 %v226
    %273 = vmatpush1.bf16.msra.mxu0 %v225
    %274 = vmatprep.subr.bf16.mxu0 %v229
    %275 = vmatpush1.bf16.msra.mxu0 %v228
    %276 = vmatprep.subr.bf16.mxu0 %v232
    %277 = vmatpush1.bf16.msra.mxu0 %v231
    %278 = vmatprep.subr.bf16.mxu0 %v235
    %279 = vmatpush1.bf16.msra.mxu0 %v234
    %280 = vmatprep.subr.bf16.mxu0 %v238
    %281 = vmatpush1.bf16.msra.mxu0 %v237
    %282 = vmatprep.subr.bf16.mxu0 %v241
    %283 = vmatpush1.bf16.msra.mxu0 %v240
    %284 = vmatprep.subr.bf16.mxu0 %v244
    %285 = vmatpush1.bf16.msra.mxu0 %v243
    %286 = vmatprep.subr.bf16.mxu0 0
    %287 = vmatpush1.bf16.msra.mxu0 0
    %288 = vmatprep.subr.bf16.mxu0 0
    %289 = vmatpush1.bf16.msra.mxu0 0
    %290 = vmatprep.subr.bf16.mxu0 0
    %291 = vmatpush1.bf16.msra.mxu0 0
    %292 = vmatprep.subr.bf16.mxu0 0
    %293 = vmatpush1.bf16.msra.mxu0 0
    %294 = vmatprep.subr.bf16.mxu0 0
    %295 = vmatpush1.bf16.msra.mxu0 0
    %296 = vmatprep.subr.bf16.mxu0 0
    %297 = vmatpush1.bf16.msra.mxu0 0
    %298 = vmatprep.subr.bf16.mxu0 0
    %299 = vmatpush1.bf16.msra.mxu0 0
    %300 = vmatprep.subr.bf16.mxu0 0
    %301 = vmatpush1.bf16.msra.mxu0 0
    %302 = vmatprep.mubr.bf16.mxu0 0
    %303 = vmatmul.mubr.bf16.gmra.mrb[0].mxu0 %v109
    %v304 = vpop.f32.mrb[0].mxu0
    %v305 = vadd.f32 0.0, %v304
    %v306 = vpop.f32.mrb[0].mxu0
    %v307 = vadd.f32 0.0, %v306
    %v308 = vpop.f32.mrb[0].mxu0
    %v309 = vadd.f32 0.0, %v308
    %v310 = vpop.f32.mrb[0].mxu0
    %v311 = vadd.f32 0.0, %v310
    %312 = vdwg.mxu0
    %313 = vmatprep.subr.bf16.mxu0 0
    %314 = vmatpush1.bf16.msra.mxu0 %v224
    %315 = vmatprep.subr.bf16.mxu0 0
    %316 = vmatpush1.bf16.msra.mxu0 %v227
    %317 = vmatprep.subr.bf16.mxu0 0
    %318 = vmatpush1.bf16.msra.mxu0 %v230
    %319 = vmatprep.subr.bf16.mxu0 0
    %320 = vmatpush1.bf16.msra.mxu0 %v233
    %321 = vmatprep.subr.bf16.mxu0 0
    %322 = vmatpush1.bf16.msra.mxu0 %v236
    %323 = vmatprep.subr.bf16.mxu0 0
    %324 = vmatpush1.bf16.msra.mxu0 %v239
    %325 = vmatprep.subr.bf16.mxu0 0
    %326 = vmatpush1.bf16.msra.mxu0 %v242
    %327 = vmatprep.subr.bf16.mxu0 0
    %328 = vmatpush1.bf16.msra.mxu0 %v245
    %329 = vmatprep.subr.bf16.mxu0 0
    %330 = vmatpush1.bf16.msra.mxu0 0
    %331 = vmatprep.subr.bf16.mxu0 0
    %332 = vmatpush1.bf16.msra.mxu0 0
    %333 = vmatprep.subr.bf16.mxu0 0
    %334 = vmatpush1.bf16.msra.mxu0 0
    %335 = vmatprep.subr.bf16.mxu0 0
    %336 = vmatpush1.bf16.msra.mxu0 0
    %337 = vmatprep.subr.bf16.mxu0 0
    %338 = vmatpush1.bf16.msra.mxu0 0
    %339 = vmatprep.subr.bf16.mxu0 0
    %340 = vmatpush1.bf16.msra.mxu0 0
    %341 = vmatprep.subr.bf16.mxu0 0
    %342 = vmatpush1.bf16.msra.mxu0 0
    %343 = vmatprep.subr.bf16.mxu0 0
    %344 = vmatpush1.bf16.msra.mxu0 0
    %345 = vmatprep.mubr.bf16.mxu0 0
    %346 = vmatmul.mubr.bf16.gmra.mrb[0].mxu0 %v109
    %v347 = vpop.f32.mrb[0].mxu0
    %v348 = vadd.f32 0.0, %v347
    %v349 = vpop.f32.mrb[0].mxu0
    %v350 = vpop.f32.mrb[0].mxu0
    %v351 = vadd.f32 0.0, %v350
    %v352 = vpop.f32.mrb[0].mxu0
    %353 = vdwg.mxu0
    %v354 = vpack.c.bf16 %v309, %v305
    %v355 = vpack.c.bf16 %v311, %v307
    %v356 = vpack.c.bf16 %v351, %v348
    %v358 = vunpack.c.l.b16 %v354
    %v359 = vunpack.c.h.b16 %v354
    %v360 = vpack.c.b16 %v358, %v358
    %v361 = vpack.c.b16 %v359, %v359
    %v363 = vunpack.c.l.b16 %v355
    %v364 = vunpack.c.h.b16 %v355
    %v365 = vpack.c.b16 %v363, %v363
    %v366 = vpack.c.b16 %v364, %v364
    %v368 = vunpack.c.l.b16 %v356
    %v369 = vunpack.c.h.b16 %v356
    %v370 = vpack.c.b16 %v368, %v368
    %v371 = vpack.c.b16 %v369, %v369
    %vm372 = vcmask 261120
    %v374 = vsel %vm372, %v360, 0
    %v377 = vsel %vm372, %v365, 0
    %379 = vmatprep.subr.bf16.mxu0 0
    %380 = vmatpush1.bf16.xpose.msra.mxu0 %v377
    %381 = vmatprep.subr.bf16.mxu0 0
    %382 = vmatpush1.bf16.xpose.msra.mxu0 0
    %383 = vmatprep.subr.bf16.mxu0 0
    %384 = vmatpush1.bf16.xpose.msra.mxu0 0
    %385 = vmatprep.subr.bf16.mxu0 0
    %386 = vmatpush1.bf16.xpose.msra.mxu0 0
    %387 = vmatprep.subr.bf16.mxu0 0
    %388 = vmatpush1.bf16.xpose.msra.mxu0 0
    %389 = vmatprep.subr.bf16.mxu0 0
    %390 = vmatpush1.bf16.xpose.msra.mxu0 0
    %391 = vmatprep.subr.bf16.mxu0 0
    %392 = vmatpush1.bf16.xpose.msra.mxu0 0
    %393 = vmatprep.subr.bf16.mxu0 0
    %394 = vmatpush1.bf16.xpose.msra.mxu0 0
    %395 = vmatprep.subr.bf16.mxu0 0
    %396 = vmatpush1.bf16.xpose.msra.mxu0 0
    %397 = vmatprep.subr.bf16.mxu0 0
    %398 = vmatpush1.bf16.xpose.msra.mxu0 0
    %399 = vmatprep.subr.bf16.mxu0 0
    %400 = vmatpush1.bf16.xpose.msra.mxu0 0
    %401 = vmatprep.subr.bf16.mxu0 0
    %402 = vmatpush1.bf16.xpose.msra.mxu0 0
    %403 = vmatprep.subr.bf16.mxu0 0
    %404 = vmatpush1.bf16.xpose.msra.mxu0 0
    %405 = vmatprep.subr.bf16.mxu0 0
    %406 = vmatpush1.bf16.xpose.msra.mxu0 0
    %407 = vmatprep.subr.bf16.mxu0 0
    %408 = vmatpush1.bf16.xpose.msra.mxu0 0
    %409 = vmatprep.subr.bf16.mxu0 0
    %410 = vmatpush1.bf16.xpose.msra.mxu0 0
    %411 = vmatprep.mubr.bf16.mxu0 0
    %412 = vmatmul.mubr.bf16.gmra.mrb[0].mxu0 %v374
    %v413 = vpop.f32.mrb[0].mxu0
    %v414 = vadd.f32 0.0, %v413
    %v415 = vpop.f32.mrb[0].mxu0
    %v416 = vpop.f32.mrb[0].mxu0
    %v417 = vpop.f32.mrb[0].mxu0
    %418 = vdwg.mxu0
    %v420 = vsel %vm372, %v361, 0
    %v423 = vsel %vm372, %v366, 0
    %425 = vmatprep.subr.bf16.mxu0 0
    %426 = vmatpush1.bf16.xpose.msra.mxu0 %v423
    %427 = vmatprep.subr.bf16.mxu0 0
    %428 = vmatpush1.bf16.xpose.msra.mxu0 0
    %429 = vmatprep.subr.bf16.mxu0 0
    %430 = vmatpush1.bf16.xpose.msra.mxu0 0
    %431 = vmatprep.subr.bf16.mxu0 0
    %432 = vmatpush1.bf16.xpose.msra.mxu0 0
    %433 = vmatprep.subr.bf16.mxu0 0
    %434 = vmatpush1.bf16.xpose.msra.mxu0 0
    %435 = vmatprep.subr.bf16.mxu0 0
    %436 = vmatpush1.bf16.xpose.msra.mxu0 0
    %437 = vmatprep.subr.bf16.mxu0 0
    %438 = vmatpush1.bf16.xpose.msra.mxu0 0
    %439 = vmatprep.subr.bf16.mxu0 0
    %440 = vmatpush1.bf16.xpose.msra.mxu0 0
    %441 = vmatprep.subr.bf16.mxu0 0
    %442 = vmatpush1.bf16.xpose.msra.mxu0 0
    %443 = vmatprep.subr.bf16.mxu0 0
    %444 = vmatpush1.bf16.xpose.msra.mxu0 0
    %445 = vmatprep.subr.bf16.mxu0 0
    %446 = vmatpush1.bf16.xpose.msra.mxu0 0
    %447 = vmatprep.subr.bf16.mxu0 0
    %448 = vmatpush1.bf16.xpose.msra.mxu0 0
    %449 = vmatprep.subr.bf16.mxu0 0
    %450 = vmatpush1.bf16.xpose.msra.mxu0 0
    %451 = vmatprep.subr.bf16.mxu0 0
    %452 = vmatpush1.bf16.xpose.msra.mxu0 0
    %453 = vmatprep.subr.bf16.mxu0 0
    %454 = vmatpush1.bf16.xpose.msra.mxu0 0
    %455 = vmatprep.subr.bf16.mxu0 0
    %456 = vmatpush1.bf16.xpose.msra.mxu0 0
    %457 = vmatprep.mubr.bf16.mxu0 0
    %458 = vmatmul.mubr.bf16.gmra.mrb[0].mxu0 %v420
    %v459 = vpop.f32.mrb[0].mxu0
    %v460 = vadd.f32 0.0, %v459
    %v461 = vpop.f32.mrb[0].mxu0
    %v462 = vpop.f32.mrb[0].mxu0
    %v463 = vpop.f32.mrb[0].mxu0
    %464 = vdwg.mxu0
    %v465 = vmul.f32 %v414, 0.17677669
    %v466 = vmul.f32 %v460, 0.17677669
    %vm467 = vcmask 64512
    %v468 = vsel %vm467, %v465, -inf
    %469 = vmax.xlane.f32.xlu0 %v468
    %v470 = vpop.xlane.xlu0 %469
    %v471 = vsel %vm467, %v466, -inf
    %472 = vmax.xlane.f32.xlu0 %v471
    %v473 = vpop.xlane.xlu0 %472
    %v474 = vsub.f32 %v465, %v470
    %v475 = vsub.f32 %v466, %v473
    %v476 = vmul.f32 %v474, 1.442695
    %v477 = vpow.pop %v476
    %v478 = vmul.f32 %v475, 1.442695
    %v479 = vpow.pop %v478
    %v480 = vsel %vm467, %v477, 0.0
    %481 = vadd.xlane.f32.xlu0 %v480
    %v482 = vpop.xlane.xlu0 %481
    %v483 = vsel %vm467, %v479, 0.0
    %484 = vadd.xlane.f32.xlu0 %v483
    %v485 = vpop.xlane.xlu0 %484
    %v486 = vrcp.pop %v482
    %v487 = vrcp.pop %v485
    %v488 = vmul.f32 %v477, %v486
    %v489 = vmul.f32 %v479, %v487
    %v490 = vpack.c.bf16 %v488, %v488
    %v491 = vpack.c.bf16 %v489, %v489
    %v493 = vsel %vm467, %v490, 0
    %vm495 = vcmask 1043456
    %v497 = vsel %vm495, %v370, 0
    %499 = vmatprep.subr.bf16.mxu0 0
    %500 = vmatpush1.bf16.msra.mxu0 %v497
    %501 = vmatprep.subr.bf16.mxu0 0
    %502 = vmatpush1.bf16.msra.mxu0 0
    %503 = vmatprep.subr.bf16.mxu0 0
    %504 = vmatpush1.bf16.msra.mxu0 0
    %505 = vmatprep.subr.bf16.mxu0 0
    %506 = vmatpush1.bf16.msra.mxu0 0
    %507 = vmatprep.subr.bf16.mxu0 0
    %508 = vmatpush1.bf16.msra.mxu0 0
    %509 = vmatprep.subr.bf16.mxu0 0
    %510 = vmatpush1.bf16.msra.mxu0 0
    %511 = vmatprep.subr.bf16.mxu0 0
    %512 = vmatpush1.bf16.msra.mxu0 0
    %513 = vmatprep.subr.bf16.mxu0 0
    %514 = vmatpush1.bf16.msra.mxu0 0
    %515 = vmatprep.subr.bf16.mxu0 0
    %516 = vmatpush1.bf16.msra.mxu0 0
    %517 = vmatprep.subr.bf16.mxu0 0
    %518 = vmatpush1.bf16.msra.mxu0 0
    %519 = vmatprep.subr.bf16.mxu0 0
    %520 = vmatpush1.bf16.msra.mxu0 0
    %521 = vmatprep.subr.bf16.mxu0 0
    %522 = vmatpush1.bf16.msra.mxu0 0
    %523 = vmatprep.subr.bf16.mxu0 0
    %524 = vmatpush1.bf16.msra.mxu0 0
    %525 = vmatprep.subr.bf16.mxu0 0
    %526 = vmatpush1.bf16.msra.mxu0 0
    %527 = vmatprep.subr.bf16.mxu0 0
    %528 = vmatpush1.bf16.msra.mxu0 0
    %529 = vmatprep.subr.bf16.mxu0 0
    %530 = vmatpush1.bf16.msra.mxu0 0
    %531 = vmatprep.mubr.bf16.mxu0 0
    %532 = vmatmul.mubr.bf16.gmra.mrb[0].mxu0 %v493
    %v533 = vpop.f32.mrb[0].mxu0
    %v534 = vadd.f32 0.0, %v533
    %v535 = vpop.f32.mrb[0].mxu0
    %v536 = vpop.f32.mrb[0].mxu0
    %v537 = vpop.f32.mrb[0].mxu0
    %538 = vdwg.mxu0
    %v540 = vsel %vm467, %v491, 0
    %v543 = vsel %vm495, %v371, 0
    %545 = vmatprep.subr.bf16.mxu0 0
    %546 = vmatpush1.bf16.msra.mxu0 %v543
    %547 = vmatprep.subr.bf16.mxu0 0
    %548 = vmatpush1.bf16.msra.mxu0 0
    %549 = vmatprep.subr.bf16.mxu0 0
    %550 = vmatpush1.bf16.msra.mxu0 0
    %551 = vmatprep.subr.bf16.mxu0 0
    %552 = vmatpush1.bf16.msra.mxu0 0
    %553 = vmatprep.subr.bf16.mxu0 0
    %554 = vmatpush1.bf16.msra.mxu0 0
    %555 = vmatprep.subr.bf16.mxu0 0
    %556 = vmatpush1.bf16.msra.mxu0 0
    %557 = vmatprep.subr.bf16.mxu0 0
    %558 = vmatpush1.bf16.msra.mxu0 0
    %559 = vmatprep.subr.bf16.mxu0 0
    %560 = vmatpush1.bf16.msra.mxu0 0
    %561 = vmatprep.subr.bf16.mxu0 0
    %562 = vmatpush1.bf16.msra.mxu0 0
    %563 = vmatprep.subr.bf16.mxu0 0
    %564 = vmatpush1.bf16.msra.mxu0 0
    %565 = vmatprep.subr.bf16.mxu0 0
    %566 = vmatpush1.bf16.msra.mxu0 0
    %567 = vmatprep.subr.bf16.mxu0 0
    %568 = vmatpush1.bf16.msra.mxu0 0
    %569 = vmatprep.subr.bf16.mxu0 0
    %570 = vmatpush1.bf16.msra.mxu0 0
    %571 = vmatprep.subr.bf16.mxu0 0
    %572 = vmatpush1.bf16.msra.mxu0 0
    %573 = vmatprep.subr.bf16.mxu0 0
    %574 = vmatpush1.bf16.msra.mxu0 0
    %575 = vmatprep.subr.bf16.mxu0 0
    %576 = vmatpush1.bf16.msra.mxu0 0
    %577 = vmatprep.mubr.bf16.mxu0 0
    %578 = vmatmul.mubr.bf16.gmra.mrb[0].mxu0 %v540
    %v579 = vpop.f32.mrb[0].mxu0
    %v580 = vadd.f32 0.0, %v579
    %v581 = vpop.f32.mrb[0].mxu0
    %v582 = vpop.f32.mrb[0].mxu0
    %v583 = vpop.f32.mrb[0].mxu0
    %584 = vdwg.mxu0
    %585 = vrot.lane.b32.xlu0 %v360, 96
    %v586 = vpop.permute.xlu0 %585
    %587 = vrot.lane.b32.xlu0 %v365, 96
    %v588 = vpop.permute.xlu0 %587
    %v590 = vsel %vm372, %v586, 0
    %v593 = vsel %vm372, %v588, 0
    %595 = vmatprep.subr.bf16.mxu0 0
    %596 = vmatpush1.bf16.xpose.msra.mxu0 %v593
    %597 = vmatprep.subr.bf16.mxu0 0
    %598 = vmatpush1.bf16.xpose.msra.mxu0 0
    %599 = vmatprep.subr.bf16.mxu0 0
    %600 = vmatpush1.bf16.xpose.msra.mxu0 0
    %601 = vmatprep.subr.bf16.mxu0 0
    %602 = vmatpush1.bf16.xpose.msra.mxu0 0
    %603 = vmatprep.subr.bf16.mxu0 0
    %604 = vmatpush1.bf16.xpose.msra.mxu0 0
    %605 = vmatprep.subr.bf16.mxu0 0
    %606 = vmatpush1.bf16.xpose.msra.mxu0 0
    %607 = vmatprep.subr.bf16.mxu0 0
    %608 = vmatpush1.bf16.xpose.msra.mxu0 0
    %609 = vmatprep.subr.bf16.mxu0 0
    %610 = vmatpush1.bf16.xpose.msra.mxu0 0
    %611 = vmatprep.subr.bf16.mxu0 0
    %612 = vmatpush1.bf16.xpose.msra.mxu0 0
    %613 = vmatprep.subr.bf16.mxu0 0
    %614 = vmatpush1.bf16.xpose.msra.mxu0 0
    %615 = vmatprep.subr.bf16.mxu0 0
    %616 = vmatpush1.bf16.xpose.msra.mxu0 0
    %617 = vmatprep.subr.bf16.mxu0 0
    %618 = vmatpush1.bf16.xpose.msra.mxu0 0
    %619 = vmatprep.subr.bf16.mxu0 0
    %620 = vmatpush1.bf16.xpose.msra.mxu0 0
    %621 = vmatprep.subr.bf16.mxu0 0
    %622 = vmatpush1.bf16.xpose.msra.mxu0 0
    %623 = vmatprep.subr.bf16.mxu0 0
    %624 = vmatpush1.bf16.xpose.msra.mxu0 0
    %625 = vmatprep.subr.bf16.mxu0 0
    %626 = vmatpush1.bf16.xpose.msra.mxu0 0
    %627 = vmatprep.mubr.bf16.mxu0 0
    %628 = vmatmul.mubr.bf16.gmra.mrb[0].mxu0 %v590
    %v629 = vpop.f32.mrb[0].mxu0
    %v630 = vadd.f32 0.0, %v629
    %v631 = vpop.f32.mrb[0].mxu0
    %v632 = vpop.f32.mrb[0].mxu0
    %v633 = vpop.f32.mrb[0].mxu0
    %634 = vdwg.mxu0
    %635 = vrot.lane.b32.xlu0 %v361, 96
    %v636 = vpop.permute.xlu0 %635
    %637 = vrot.lane.b32.xlu0 %v366, 96
    %v638 = vpop.permute.xlu0 %637
    %v640 = vsel %vm372, %v636, 0
    %v643 = vsel %vm372, %v638, 0
    %645 = vmatprep.subr.bf16.mxu0 0
    %646 = vmatpush1.bf16.xpose.msra.mxu0 %v643
    %647 = vmatprep.subr.bf16.mxu0 0
    %648 = vmatpush1.bf16.xpose.msra.mxu0 0
    %649 = vmatprep.subr.bf16.mxu0 0
    %650 = vmatpush1.bf16.xpose.msra.mxu0 0
    %651 = vmatprep.subr.bf16.mxu0 0
    %652 = vmatpush1.bf16.xpose.msra.mxu0 0
    %653 = vmatprep.subr.bf16.mxu0 0
    %654 = vmatpush1.bf16.xpose.msra.mxu0 0
    %655 = vmatprep.subr.bf16.mxu0 0
    %656 = vmatpush1.bf16.xpose.msra.mxu0 0
    %657 = vmatprep.subr.bf16.mxu0 0
    %658 = vmatpush1.bf16.xpose.msra.mxu0 0
    %659 = vmatprep.subr.bf16.mxu0 0
    %660 = vmatpush1.bf16.xpose.msra.mxu0 0
    %661 = vmatprep.subr.bf16.mxu0 0
    %662 = vmatpush1.bf16.xpose.msra.mxu0 0
    %663 = vmatprep.subr.bf16.mxu0 0
    %664 = vmatpush1.bf16.xpose.msra.mxu0 0
    %665 = vmatprep.subr.bf16.mxu0 0
    %666 = vmatpush1.bf16.xpose.msra.mxu0 0
    %667 = vmatprep.subr.bf16.mxu0 0
    %668 = vmatpush1.bf16.xpose.msra.mxu0 0
    %669 = vmatprep.subr.bf16.mxu0 0
    %670 = vmatpush1.bf16.xpose.msra.mxu0 0
    %671 = vmatprep.subr.bf16.mxu0 0
    %672 = vmatpush1.bf16.xpose.msra.mxu0 0
    %673 = vmatprep.subr.bf16.mxu0 0
    %674 = vmatpush1.bf16.xpose.msra.mxu0 0
    %675 = vmatprep.subr.bf16.mxu0 0
    %676 = vmatpush1.bf16.xpose.msra.mxu0 0
    %677 = vmatprep.mubr.bf16.mxu0 0
    %678 = vmatmul.mubr.bf16.gmra.mrb[0].mxu0 %v640
    %v679 = vpop.f32.mrb[0].mxu0
    %v680 = vadd.f32 0.0, %v679
    %v681 = vpop.f32.mrb[0].mxu0
    %v682 = vpop.f32.mrb[0].mxu0
    %v683 = vpop.f32.mrb[0].mxu0
    %684 = vdwg.mxu0
    %v685 = vmul.f32 %v630, 0.17677669
    %v686 = vmul.f32 %v680, 0.17677669
    %v687 = vsel %vm467, %v685, -inf
    %688 = vmax.xlane.f32.xlu0 %v687
    %v689 = vpop.xlane.xlu0 %688
    %v690 = vsel %vm467, %v686, -inf
    %691 = vmax.xlane.f32.xlu0 %v690
    %v692 = vpop.xlane.xlu0 %691
    %v693 = vsub.f32 %v685, %v689
    %v694 = vsub.f32 %v686, %v692
    %v695 = vmul.f32 %v693, 1.442695
    %v696 = vpow.pop %v695
    %v697 = vmul.f32 %v694, 1.442695
    %v698 = vpow.pop %v697
    %v699 = vsel %vm467, %v696, 0.0
    %700 = vadd.xlane.f32.xlu0 %v699
    %v701 = vpop.xlane.xlu0 %700
    %v702 = vsel %vm467, %v698, 0.0
    %703 = vadd.xlane.f32.xlu0 %v702
    %v704 = vpop.xlane.xlu0 %703
    %v705 = vrcp.pop %v701
    %v706 = vrcp.pop %v704
    %v707 = vmul.f32 %v696, %v705
    %v708 = vmul.f32 %v698, %v706
    %v709 = vpack.c.bf16 %v707, %v707
    %v710 = vpack.c.bf16 %v708, %v708
    %711 = vrot.lane.b32.xlu0 %v370, 96
    %v712 = vpop.permute.xlu0 %711
    %v714 = vsel %vm467, %v709, 0
    %v717 = vsel %vm495, %v712, 0
    %719 = vmatprep.subr.bf16.mxu0 0
    %720 = vmatpush1.bf16.msra.mxu0 %v717
    %721 = vmatprep.subr.bf16.mxu0 0
    %722 = vmatpush1.bf16.msra.mxu0 0
    %723 = vmatprep.subr.bf16.mxu0 0
    %724 = vmatpush1.bf16.msra.mxu0 0
    %725 = vmatprep.subr.bf16.mxu0 0
    %726 = vmatpush1.bf16.msra.mxu0 0
    %727 = vmatprep.subr.bf16.mxu0 0
    %728 = vmatpush1.bf16.msra.mxu0 0
    %729 = vmatprep.subr.bf16.mxu0 0
    %730 = vmatpush1.bf16.msra.mxu0 0
    %731 = vmatprep.subr.bf16.mxu0 0
    %732 = vmatpush1.bf16.msra.mxu0 0
    %733 = vmatprep.subr.bf16.mxu0 0
    %734 = vmatpush1.bf16.msra.mxu0 0
    %735 = vmatprep.subr.bf16.mxu0 0
    %736 = vmatpush1.bf16.msra.mxu0 0
    %737 = vmatprep.subr.bf16.mxu0 0
    %738 = vmatpush1.bf16.msra.mxu0 0
    %739 = vmatprep.subr.bf16.mxu0 0
    %740 = vmatpush1.bf16.msra.mxu0 0
    %741 = vmatprep.subr.bf16.mxu0 0
    %742 = vmatpush1.bf16.msra.mxu0 0
    %743 = vmatprep.subr.bf16.mxu0 0
    %744 = vmatpush1.bf16.msra.mxu0 0
    %745 = vmatprep.subr.bf16.mxu0 0
    %746 = vmatpush1.bf16.msra.mxu0 0
    %747 = vmatprep.subr.bf16.mxu0 0
    %748 = vmatpush1.bf16.msra.mxu0 0
    %749 = vmatprep.subr.bf16.mxu0 0
    %750 = vmatpush1.bf16.msra.mxu0 0
    %751 = vmatprep.mubr.bf16.mxu0 0
    %752 = vmatmul.mubr.bf16.gmra.mrb[0].mxu0 %v714
    %v753 = vpop.f32.mrb[0].mxu0
    %v754 = vadd.f32 0.0, %v753
    %v755 = vpop.f32.mrb[0].mxu0
    %v756 = vpop.f32.mrb[0].mxu0
    %v757 = vpop.f32.mrb[0].mxu0
    %758 = vdwg.mxu0
    %759 = vrot.lane.b32.xlu0 %v371, 96
    %v760 = vpop.permute.xlu0 %759
    %v762 = vsel %vm467, %v710, 0
    %v765 = vsel %vm495, %v760, 0
    %767 = vmatprep.subr.bf16.mxu0 0
    %768 = vmatpush1.bf16.msra.mxu0 %v765
    %769 = vmatprep.subr.bf16.mxu0 0
    %770 = vmatpush1.bf16.msra.mxu0 0
    %771 = vmatprep.subr.bf16.mxu0 0
    %772 = vmatpush1.bf16.msra.mxu0 0
    %773 = vmatprep.subr.bf16.mxu0 0
    %774 = vmatpush1.bf16.msra.mxu0 0
    %775 = vmatprep.subr.bf16.mxu0 0
    %776 = vmatpush1.bf16.msra.mxu0 0
    %777 = vmatprep.subr.bf16.mxu0 0
    %778 = vmatpush1.bf16.msra.mxu0 0
    %779 = vmatprep.subr.bf16.mxu0 0
    %780 = vmatpush1.bf16.msra.mxu0 0
    %781 = vmatprep.subr.bf16.mxu0 0
    %782 = vmatpush1.bf16.msra.mxu0 0
    %783 = vmatprep.subr.bf16.mxu0 0
    %784 = vmatpush1.bf16.msra.mxu0 0
    %785 = vmatprep.subr.bf16.mxu0 0
    %786 = vmatpush1.bf16.msra.mxu0 0
    %787 = vmatprep.subr.bf16.mxu0 0
    %788 = vmatpush1.bf16.msra.mxu0 0
    %789 = vmatprep.subr.bf16.mxu0 0
    %790 = vmatpush1.bf16.msra.mxu0 0
    %791 = vmatprep.subr.bf16.mxu0 0
    %792 = vmatpush1.bf16.msra.mxu0 0
    %793 = vmatprep.subr.bf16.mxu0 0
    %794 = vmatpush1.bf16.msra.mxu0 0
    %795 = vmatprep.subr.bf16.mxu0 0
    %796 = vmatpush1.bf16.msra.mxu0 0
    %797 = vmatprep.subr.bf16.mxu0 0
    %798 = vmatpush1.bf16.msra.mxu0 0
    %799 = vmatprep.mubr.bf16.mxu0 0
    %800 = vmatmul.mubr.bf16.gmra.mrb[0].mxu0 %v762
    %v801 = vpop.f32.mrb[0].mxu0
    %v802 = vadd.f32 0.0, %v801
    %v803 = vpop.f32.mrb[0].mxu0
    %v804 = vpop.f32.mrb[0].mxu0
    %v805 = vpop.f32.mrb[0].mxu0
    %806 = vdwg.mxu0
    %807 = vrot.lane.b32.xlu0 %v360, 64
    %v808 = vpop.permute.xlu0 %807
    %809 = vrot.lane.b32.xlu0 %v365, 64
    %v810 = vpop.permute.xlu0 %809
    %v812 = vsel %vm372, %v808, 0
    %v815 = vsel %vm372, %v810, 0
    %817 = vmatprep.subr.bf16.mxu0 0
    %818 = vmatpush1.bf16.xpose.msra.mxu0 %v815
    %819 = vmatprep.subr.bf16.mxu0 0
    %820 = vmatpush1.bf16.xpose.msra.mxu0 0
    %821 = vmatprep.subr.bf16.mxu0 0
    %822 = vmatpush1.bf16.xpose.msra.mxu0 0
    %823 = vmatprep.subr.bf16.mxu0 0
    %824 = vmatpush1.bf16.xpose.msra.mxu0 0
    %825 = vmatprep.subr.bf16.mxu0 0
    %826 = vmatpush1.bf16.xpose.msra.mxu0 0
    %827 = vmatprep.subr.bf16.mxu0 0
    %828 = vmatpush1.bf16.xpose.msra.mxu0 0
    %829 = vmatprep.subr.bf16.mxu0 0
    %830 = vmatpush1.bf16.xpose.msra.mxu0 0
    %831 = vmatprep.subr.bf16.mxu0 0
    %832 = vmatpush1.bf16.xpose.msra.mxu0 0
    %833 = vmatprep.subr.bf16.mxu0 0
    %834 = vmatpush1.bf16.xpose.msra.mxu0 0
    %835 = vmatprep.subr.bf16.mxu0 0
    %836 = vmatpush1.bf16.xpose.msra.mxu0 0
    %837 = vmatprep.subr.bf16.mxu0 0
    %838 = vmatpush1.bf16.xpose.msra.mxu0 0
    %839 = vmatprep.subr.bf16.mxu0 0
    %840 = vmatpush1.bf16.xpose.msra.mxu0 0
    %841 = vmatprep.subr.bf16.mxu0 0
    %842 = vmatpush1.bf16.xpose.msra.mxu0 0
    %843 = vmatprep.subr.bf16.mxu0 0
    %844 = vmatpush1.bf16.xpose.msra.mxu0 0
    %845 = vmatprep.subr.bf16.mxu0 0
    %846 = vmatpush1.bf16.xpose.msra.mxu0 0
    %847 = vmatprep.subr.bf16.mxu0 0
    %848 = vmatpush1.bf16.xpose.msra.mxu0 0
    %849 = vmatprep.mubr.bf16.mxu0 0
    %850 = vmatmul.mubr.bf16.gmra.mrb[0].mxu0 %v812
    %v851 = vpop.f32.mrb[0].mxu0
    %v852 = vadd.f32 0.0, %v851
    %v853 = vpop.f32.mrb[0].mxu0
    %v854 = vpop.f32.mrb[0].mxu0
    %v855 = vpop.f32.mrb[0].mxu0
    %856 = vdwg.mxu0
    %857 = vrot.lane.b32.xlu0 %v361, 64
    %v858 = vpop.permute.xlu0 %857
    %859 = vrot.lane.b32.xlu0 %v366, 64
    %v860 = vpop.permute.xlu0 %859
    %v862 = vsel %vm372, %v858, 0
    %v865 = vsel %vm372, %v860, 0
    %867 = vmatprep.subr.bf16.mxu0 0
    %868 = vmatpush1.bf16.xpose.msra.mxu0 %v865
    %869 = vmatprep.subr.bf16.mxu0 0
    %870 = vmatpush1.bf16.xpose.msra.mxu0 0
    %871 = vmatprep.subr.bf16.mxu0 0
    %872 = vmatpush1.bf16.xpose.msra.mxu0 0
    %873 = vmatprep.subr.bf16.mxu0 0
    %874 = vmatpush1.bf16.xpose.msra.mxu0 0
    %875 = vmatprep.subr.bf16.mxu0 0
    %876 = vmatpush1.bf16.xpose.msra.mxu0 0
    %877 = vmatprep.subr.bf16.mxu0 0
    %878 = vmatpush1.bf16.xpose.msra.mxu0 0
    %879 = vmatprep.subr.bf16.mxu0 0
    %880 = vmatpush1.bf16.xpose.msra.mxu0 0
    %881 = vmatprep.subr.bf16.mxu0 0
    %882 = vmatpush1.bf16.xpose.msra.mxu0 0
    %883 = vmatprep.subr.bf16.mxu0 0
    %884 = vmatpush1.bf16.xpose.msra.mxu0 0
    %885 = vmatprep.subr.bf16.mxu0 0
    %886 = vmatpush1.bf16.xpose.msra.mxu0 0
    %887 = vmatprep.subr.bf16.mxu0 0
    %888 = vmatpush1.bf16.xpose.msra.mxu0 0
    %889 = vmatprep.subr.bf16.mxu0 0
    %890 = vmatpush1.bf16.xpose.msra.mxu0 0
    %891 = vmatprep.subr.bf16.mxu0 0
    %892 = vmatpush1.bf16.xpose.msra.mxu0 0
    %893 = vmatprep.subr.bf16.mxu0 0
    %894 = vmatpush1.bf16.xpose.msra.mxu0 0
    %895 = vmatprep.subr.bf16.mxu0 0
    %896 = vmatpush1.bf16.xpose.msra.mxu0 0
    %897 = vmatprep.subr.bf16.mxu0 0
    %898 = vmatpush1.bf16.xpose.msra.mxu0 0
    %899 = vmatprep.mubr.bf16.mxu0 0
    %900 = vmatmul.mubr.bf16.gmra.mrb[0].mxu0 %v862
    %v901 = vpop.f32.mrb[0].mxu0
    %v902 = vadd.f32 0.0, %v901
    %v903 = vpop.f32.mrb[0].mxu0
    %v904 = vpop.f32.mrb[0].mxu0
    %v905 = vpop.f32.mrb[0].mxu0
    %906 = vdwg.mxu0
    %v907 = vmul.f32 %v852, 0.17677669
    %v908 = vmul.f32 %v902, 0.17677669
    %v909 = vsel %vm467, %v907, -inf
    %910 = vmax.xlane.f32.xlu0 %v909
    %v911 = vpop.xlane.xlu0 %910
    %v912 = vsel %vm467, %v908, -inf
    %913 = vmax.xlane.f32.xlu0 %v912
    %v914 = vpop.xlane.xlu0 %913
    %v915 = vsub.f32 %v907, %v911
    %v916 = vsub.f32 %v908, %v914
    %v917 = vmul.f32 %v915, 1.442695
    %v918 = vpow.pop %v917
    %v919 = vmul.f32 %v916, 1.442695
    %v920 = vpow.pop %v919
    %v921 = vsel %vm467, %v918, 0.0
    %922 = vadd.xlane.f32.xlu0 %v921
    %v923 = vpop.xlane.xlu0 %922
    %v924 = vsel %vm467, %v920, 0.0
    %925 = vadd.xlane.f32.xlu0 %v924
    %v926 = vpop.xlane.xlu0 %925
    %v927 = vrcp.pop %v923
    %v928 = vrcp.pop %v926
    %v929 = vmul.f32 %v918, %v927
    %v930 = vmul.f32 %v920, %v928
    %v931 = vpack.c.bf16 %v929, %v929
    %v932 = vpack.c.bf16 %v930, %v930
    %933 = vrot.lane.b32.xlu0 %v370, 64
    %v934 = vpop.permute.xlu0 %933
    %v936 = vsel %vm467, %v931, 0
    %v939 = vsel %vm495, %v934, 0
    %941 = vmatprep.subr.bf16.mxu0 0
    %942 = vmatpush1.bf16.msra.mxu0 %v939
    %943 = vmatprep.subr.bf16.mxu0 0
    %944 = vmatpush1.bf16.msra.mxu0 0
    %945 = vmatprep.subr.bf16.mxu0 0
    %946 = vmatpush1.bf16.msra.mxu0 0
    %947 = vmatprep.subr.bf16.mxu0 0
    %948 = vmatpush1.bf16.msra.mxu0 0
    %949 = vmatprep.subr.bf16.mxu0 0
    %950 = vmatpush1.bf16.msra.mxu0 0
    %951 = vmatprep.subr.bf16.mxu0 0
    %952 = vmatpush1.bf16.msra.mxu0 0
    %953 = vmatprep.subr.bf16.mxu0 0
    %954 = vmatpush1.bf16.msra.mxu0 0
    %955 = vmatprep.subr.bf16.mxu0 0
    %956 = vmatpush1.bf16.msra.mxu0 0
    %957 = vmatprep.subr.bf16.mxu0 0
    %958 = vmatpush1.bf16.msra.mxu0 0
    %959 = vmatprep.subr.bf16.mxu0 0
    %960 = vmatpush1.bf16.msra.mxu0 0
    %961 = vmatprep.subr.bf16.mxu0 0
    %962 = vmatpush1.bf16.msra.mxu0 0
    %963 = vmatprep.subr.bf16.mxu0 0
    %964 = vmatpush1.bf16.msra.mxu0 0
    %965 = vmatprep.subr.bf16.mxu0 0
    %966 = vmatpush1.bf16.msra.mxu0 0
    %967 = vmatprep.subr.bf16.mxu0 0
    %968 = vmatpush1.bf16.msra.mxu0 0
    %969 = vmatprep.subr.bf16.mxu0 0
    %970 = vmatpush1.bf16.msra.mxu0 0
    %971 = vmatprep.subr.bf16.mxu0 0
    %972 = vmatpush1.bf16.msra.mxu0 0
    %973 = vmatprep.mubr.bf16.mxu0 0
    %974 = vmatmul.mubr.bf16.gmra.mrb[0].mxu0 %v936
    %v975 = vpop.f32.mrb[0].mxu0
    %v976 = vadd.f32 0.0, %v975
    %v977 = vpop.f32.mrb[0].mxu0
    %v978 = vpop.f32.mrb[0].mxu0
    %v979 = vpop.f32.mrb[0].mxu0
    %980 = vdwg.mxu0
    %981 = vrot.lane.b32.xlu0 %v371, 64
    %v982 = vpop.permute.xlu0 %981
    %v984 = vsel %vm467, %v932, 0
    %v987 = vsel %vm495, %v982, 0
    %989 = vmatprep.subr.bf16.mxu0 0
    %990 = vmatpush1.bf16.msra.mxu0 %v987
    %991 = vmatprep.subr.bf16.mxu0 0
    %992 = vmatpush1.bf16.msra.mxu0 0
    %993 = vmatprep.subr.bf16.mxu0 0
    %994 = vmatpush1.bf16.msra.mxu0 0
    %995 = vmatprep.subr.bf16.mxu0 0
    %996 = vmatpush1.bf16.msra.mxu0 0
    %997 = vmatprep.subr.bf16.mxu0 0
    %998 = vmatpush1.bf16.msra.mxu0 0
    %999 = vmatprep.subr.bf16.mxu0 0
    %1000 = vmatpush1.bf16.msra.mxu0 0
    %1001 = vmatprep.subr.bf16.mxu0 0
    %1002 = vmatpush1.bf16.msra.mxu0 0
    %1003 = vmatprep.subr.bf16.mxu0 0
    %1004 = vmatpush1.bf16.msra.mxu0 0
    %1005 = vmatprep.subr.bf16.mxu0 0
    %1006 = vmatpush1.bf16.msra.mxu0 0
    %1007 = vmatprep.subr.bf16.mxu0 0
    %1008 = vmatpush1.bf16.msra.mxu0 0
    %1009 = vmatprep.subr.bf16.mxu0 0
    %1010 = vmatpush1.bf16.msra.mxu0 0
    %1011 = vmatprep.subr.bf16.mxu0 0
    %1012 = vmatpush1.bf16.msra.mxu0 0
    %1013 = vmatprep.subr.bf16.mxu0 0
    %1014 = vmatpush1.bf16.msra.mxu0 0
    %1015 = vmatprep.subr.bf16.mxu0 0
    %1016 = vmatpush1.bf16.msra.mxu0 0
    %1017 = vmatprep.subr.bf16.mxu0 0
    %1018 = vmatpush1.bf16.msra.mxu0 0
    %1019 = vmatprep.subr.bf16.mxu0 0
    %1020 = vmatpush1.bf16.msra.mxu0 0
    %1021 = vmatprep.mubr.bf16.mxu0 0
    %1022 = vmatmul.mubr.bf16.gmra.mrb[0].mxu0 %v984
    %v1023 = vpop.f32.mrb[0].mxu0
    %v1024 = vadd.f32 0.0, %v1023
    %v1025 = vpop.f32.mrb[0].mxu0
    %v1026 = vpop.f32.mrb[0].mxu0
    %v1027 = vpop.f32.mrb[0].mxu0
    %1028 = vdwg.mxu0
    %1029 = vrot.lane.b32.xlu0 %v360, 32
    %v1030 = vpop.permute.xlu0 %1029
    %1031 = vrot.lane.b32.xlu0 %v365, 32
    %v1032 = vpop.permute.xlu0 %1031
    %v1034 = vsel %vm372, %v1030, 0
    %v1037 = vsel %vm372, %v1032, 0
    %1039 = vmatprep.subr.bf16.mxu0 0
    %1040 = vmatpush1.bf16.xpose.msra.mxu0 %v1037
    %1041 = vmatprep.subr.bf16.mxu0 0
    %1042 = vmatpush1.bf16.xpose.msra.mxu0 0
    %1043 = vmatprep.subr.bf16.mxu0 0
    %1044 = vmatpush1.bf16.xpose.msra.mxu0 0
    %1045 = vmatprep.subr.bf16.mxu0 0
    %1046 = vmatpush1.bf16.xpose.msra.mxu0 0
    %1047 = vmatprep.subr.bf16.mxu0 0
    %1048 = vmatpush1.bf16.xpose.msra.mxu0 0
    %1049 = vmatprep.subr.bf16.mxu0 0
    %1050 = vmatpush1.bf16.xpose.msra.mxu0 0
    %1051 = vmatprep.subr.bf16.mxu0 0
    %1052 = vmatpush1.bf16.xpose.msra.mxu0 0
    %1053 = vmatprep.subr.bf16.mxu0 0
    %1054 = vmatpush1.bf16.xpose.msra.mxu0 0
    %1055 = vmatprep.subr.bf16.mxu0 0
    %1056 = vmatpush1.bf16.xpose.msra.mxu0 0
    %1057 = vmatprep.subr.bf16.mxu0 0
    %1058 = vmatpush1.bf16.xpose.msra.mxu0 0
    %1059 = vmatprep.subr.bf16.mxu0 0
    %1060 = vmatpush1.bf16.xpose.msra.mxu0 0
    %1061 = vmatprep.subr.bf16.mxu0 0
    %1062 = vmatpush1.bf16.xpose.msra.mxu0 0
    %1063 = vmatprep.subr.bf16.mxu0 0
    %1064 = vmatpush1.bf16.xpose.msra.mxu0 0
    %1065 = vmatprep.subr.bf16.mxu0 0
    %1066 = vmatpush1.bf16.xpose.msra.mxu0 0
    %1067 = vmatprep.subr.bf16.mxu0 0
    %1068 = vmatpush1.bf16.xpose.msra.mxu0 0
    %1069 = vmatprep.subr.bf16.mxu0 0
    %1070 = vmatpush1.bf16.xpose.msra.mxu0 0
    %1071 = vmatprep.mubr.bf16.mxu0 0
    %1072 = vmatmul.mubr.bf16.gmra.mrb[0].mxu0 %v1034
    %v1073 = vpop.f32.mrb[0].mxu0
    %v1074 = vadd.f32 0.0, %v1073
    %v1075 = vpop.f32.mrb[0].mxu0
    %v1076 = vpop.f32.mrb[0].mxu0
    %v1077 = vpop.f32.mrb[0].mxu0
    %1078 = vdwg.mxu0
    %1079 = vrot.lane.b32.xlu0 %v361, 32
    %v1080 = vpop.permute.xlu0 %1079
    %1081 = vrot.lane.b32.xlu0 %v366, 32
    %v1082 = vpop.permute.xlu0 %1081
    %v1084 = vsel %vm372, %v1080, 0
    %v1087 = vsel %vm372, %v1082, 0
    %1089 = vmatprep.subr.bf16.mxu0 0
    %1090 = vmatpush1.bf16.xpose.msra.mxu0 %v1087
    %1091 = vmatprep.subr.bf16.mxu0 0
    %1092 = vmatpush1.bf16.xpose.msra.mxu0 0
    %1093 = vmatprep.subr.bf16.mxu0 0
    %1094 = vmatpush1.bf16.xpose.msra.mxu0 0
    %1095 = vmatprep.subr.bf16.mxu0 0
    %1096 = vmatpush1.bf16.xpose.msra.mxu0 0
    %1097 = vmatprep.subr.bf16.mxu0 0
    %1098 = vmatpush1.bf16.xpose.msra.mxu0 0
    %1099 = vmatprep.subr.bf16.mxu0 0
    %1100 = vmatpush1.bf16.xpose.msra.mxu0 0
    %1101 = vmatprep.subr.bf16.mxu0 0
    %1102 = vmatpush1.bf16.xpose.msra.mxu0 0
    %1103 = vmatprep.subr.bf16.mxu0 0
    %1104 = vmatpush1.bf16.xpose.msra.mxu0 0
    %1105 = vmatprep.subr.bf16.mxu0 0
    %1106 = vmatpush1.bf16.xpose.msra.mxu0 0
    %1107 = vmatprep.subr.bf16.mxu0 0
    %1108 = vmatpush1.bf16.xpose.msra.mxu0 0
    %1109 = vmatprep.subr.bf16.mxu0 0
    %1110 = vmatpush1.bf16.xpose.msra.mxu0 0
    %1111 = vmatprep.subr.bf16.mxu0 0
    %1112 = vmatpush1.bf16.xpose.msra.mxu0 0
    %1113 = vmatprep.subr.bf16.mxu0 0
    %1114 = vmatpush1.bf16.xpose.msra.mxu0 0
    %1115 = vmatprep.subr.bf16.mxu0 0
    %1116 = vmatpush1.bf16.xpose.msra.mxu0 0
    %1117 = vmatprep.subr.bf16.mxu0 0
    %1118 = vmatpush1.bf16.xpose.msra.mxu0 0
    %1119 = vmatprep.subr.bf16.mxu0 0
    %1120 = vmatpush1.bf16.xpose.msra.mxu0 0
    %1121 = vmatprep.mubr.bf16.mxu0 0
    %1122 = vmatmul.mubr.bf16.gmra.mrb[0].mxu0 %v1084
    %v1123 = vpop.f32.mrb[0].mxu0
    %v1124 = vadd.f32 0.0, %v1123
    %v1125 = vpop.f32.mrb[0].mxu0
    %v1126 = vpop.f32.mrb[0].mxu0
    %v1127 = vpop.f32.mrb[0].mxu0
    %1128 = vdwg.mxu0
    %v1129 = vmul.f32 %v1074, 0.17677669
    %v1130 = vmul.f32 %v1124, 0.17677669
    %v1131 = vsel %vm467, %v1129, -inf
    %1132 = vmax.xlane.f32.xlu0 %v1131
    %v1133 = vpop.xlane.xlu0 %1132
    %v1134 = vsel %vm467, %v1130, -inf
    %1135 = vmax.xlane.f32.xlu0 %v1134
    %v1136 = vpop.xlane.xlu0 %1135
    %v1137 = vsub.f32 %v1129, %v1133
    %v1138 = vsub.f32 %v1130, %v1136
    %v1139 = vmul.f32 %v1137, 1.442695
    %v1140 = vpow.pop %v1139
    %v1141 = vmul.f32 %v1138, 1.442695
    %v1142 = vpow.pop %v1141
    %v1143 = vsel %vm467, %v1140, 0.0
    %1144 = vadd.xlane.f32.xlu0 %v1143
    %v1145 = vpop.xlane.xlu0 %1144
    %v1146 = vsel %vm467, %v1142, 0.0
    %1147 = vadd.xlane.f32.xlu0 %v1146
    %v1148 = vpop.xlane.xlu0 %1147
    %v1149 = vrcp.pop %v1145
    %v1150 = vrcp.pop %v1148
    %v1151 = vmul.f32 %v1140, %v1149
    %v1152 = vmul.f32 %v1142, %v1150
    %v1153 = vpack.c.bf16 %v1151, %v1151
    %v1154 = vpack.c.bf16 %v1152, %v1152
    %1155 = vrot.lane.b32.xlu0 %v370, 32
    %v1156 = vpop.permute.xlu0 %1155
    %v1158 = vsel %vm467, %v1153, 0
    %v1161 = vsel %vm495, %v1156, 0
    %1163 = vmatprep.subr.bf16.mxu0 0
    %1164 = vmatpush1.bf16.msra.mxu0 %v1161
    %1165 = vmatprep.subr.bf16.mxu0 0
    %1166 = vmatpush1.bf16.msra.mxu0 0
    %1167 = vmatprep.subr.bf16.mxu0 0
    %1168 = vmatpush1.bf16.msra.mxu0 0
    %1169 = vmatprep.subr.bf16.mxu0 0
    %1170 = vmatpush1.bf16.msra.mxu0 0
    %1171 = vmatprep.subr.bf16.mxu0 0
    %1172 = vmatpush1.bf16.msra.mxu0 0
    %1173 = vmatprep.subr.bf16.mxu0 0
    %1174 = vmatpush1.bf16.msra.mxu0 0
    %1175 = vmatprep.subr.bf16.mxu0 0
    %1176 = vmatpush1.bf16.msra.mxu0 0
    %1177 = vmatprep.subr.bf16.mxu0 0
    %1178 = vmatpush1.bf16.msra.mxu0 0
    %1179 = vmatprep.subr.bf16.mxu0 0
    %1180 = vmatpush1.bf16.msra.mxu0 0
    %1181 = vmatprep.subr.bf16.mxu0 0
    %1182 = vmatpush1.bf16.msra.mxu0 0
    %1183 = vmatprep.subr.bf16.mxu0 0
    %1184 = vmatpush1.bf16.msra.mxu0 0
    %1185 = vmatprep.subr.bf16.mxu0 0
    %1186 = vmatpush1.bf16.msra.mxu0 0
    %1187 = vmatprep.subr.bf16.mxu0 0
    %1188 = vmatpush1.bf16.msra.mxu0 0
    %1189 = vmatprep.subr.bf16.mxu0 0
    %1190 = vmatpush1.bf16.msra.mxu0 0
    %1191 = vmatprep.subr.bf16.mxu0 0
    %1192 = vmatpush1.bf16.msra.mxu0 0
    %1193 = vmatprep.subr.bf16.mxu0 0
    %1194 = vmatpush1.bf16.msra.mxu0 0
    %1195 = vmatprep.mubr.bf16.mxu0 0
    %1196 = vmatmul.mubr.bf16.gmra.mrb[0].mxu0 %v1158
    %v1197 = vpop.f32.mrb[0].mxu0
    %v1198 = vadd.f32 0.0, %v1197
    %v1199 = vpop.f32.mrb[0].mxu0
    %v1200 = vpop.f32.mrb[0].mxu0
    %v1201 = vpop.f32.mrb[0].mxu0
    %1202 = vdwg.mxu0
    %1203 = vrot.lane.b32.xlu0 %v371, 32
    %v1204 = vpop.permute.xlu0 %1203
    %v1206 = vsel %vm467, %v1154, 0
    %v1209 = vsel %vm495, %v1204, 0
    %1211 = vmatprep.subr.bf16.mxu0 0
    %1212 = vmatpush1.bf16.msra.mxu0 %v1209
    %1213 = vmatprep.subr.bf16.mxu0 0
    %1214 = vmatpush1.bf16.msra.mxu0 0
    %1215 = vmatprep.subr.bf16.mxu0 0
    %1216 = vmatpush1.bf16.msra.mxu0 0
    %1217 = vmatprep.subr.bf16.mxu0 0
    %1218 = vmatpush1.bf16.msra.mxu0 0
    %1219 = vmatprep.subr.bf16.mxu0 0
    %1220 = vmatpush1.bf16.msra.mxu0 0
    %1221 = vmatprep.subr.bf16.mxu0 0
    %1222 = vmatpush1.bf16.msra.mxu0 0
    %1223 = vmatprep.subr.bf16.mxu0 0
    %1224 = vmatpush1.bf16.msra.mxu0 0
    %1225 = vmatprep.subr.bf16.mxu0 0
    %1226 = vmatpush1.bf16.msra.mxu0 0
    %1227 = vmatprep.subr.bf16.mxu0 0
    %1228 = vmatpush1.bf16.msra.mxu0 0
    %1229 = vmatprep.subr.bf16.mxu0 0
    %1230 = vmatpush1.bf16.msra.mxu0 0
    %1231 = vmatprep.subr.bf16.mxu0 0
    %1232 = vmatpush1.bf16.msra.mxu0 0
    %1233 = vmatprep.subr.bf16.mxu0 0
    %1234 = vmatpush1.bf16.msra.mxu0 0
    %1235 = vmatprep.subr.bf16.mxu0 0
    %1236 = vmatpush1.bf16.msra.mxu0 0
    %1237 = vmatprep.subr.bf16.mxu0 0
    %1238 = vmatpush1.bf16.msra.mxu0 0
    %1239 = vmatprep.subr.bf16.mxu0 0
    %1240 = vmatpush1.bf16.msra.mxu0 0
    %1241 = vmatprep.subr.bf16.mxu0 0
    %1242 = vmatpush1.bf16.msra.mxu0 0
    %1243 = vmatprep.mubr.bf16.mxu0 0
    %1244 = vmatmul.mubr.bf16.gmra.mrb[0].mxu0 %v1206
    %v1245 = vpop.f32.mrb[0].mxu0
    %v1246 = vadd.f32 0.0, %v1245
    %v1247 = vpop.f32.mrb[0].mxu0
    %v1248 = vpop.f32.mrb[0].mxu0
    %v1249 = vpop.f32.mrb[0].mxu0
    %1250 = vdwg.mxu0
    %1253 = vrot.lane.b32.xlu0 %v754, 32
    %v1254 = vpop.permute.xlu0 %1253
    %1255 = vrot.lane.b32.xlu0 %v802, 32
    %v1256 = vpop.permute.xlu0 %1255
    %1261 = vrot.lane.b32.xlu0 %v976, 64
    %v1262 = vpop.permute.xlu0 %1261
    %1263 = vrot.lane.b32.xlu0 %v1024, 64
    %v1264 = vpop.permute.xlu0 %1263
    %1269 = vrot.lane.b32.xlu0 %v1198, 96
    %v1270 = vpop.permute.xlu0 %1269
    %1271 = vrot.lane.b32.xlu0 %v1246, 96
    %v1272 = vpop.permute.xlu0 %1271
    %v1275 = vsel %vm372, %v534, %v1254
    %v1276 = vsel %vm372, %v580, %v1256
    %vm1277 = vcmask 523264
    %v1278 = vsel %vm1277, %v1275, %v1262
    %v1279 = vsel %vm1277, %v1276, %v1264
    %vm1280 = vcmask 785408
    %v1281 = vsel %vm1280, %v1278, %v1270
    %v1282 = vsel %vm1280, %v1279, %v1272
    %v1283 = vpack.c.bf16 %v1281, %v1281
    %v1284 = vpack.c.bf16 %v1282, %v1282
    %v1285 = vld [vmem:[%s3] sm:$0xf]
    %v1286 = vld [vmem:[%s3 + $0x4] sm:$0xf]
    %v1287 = vld [vmem:[%s3 + $0x8] sm:$0xf]
    %v1288 = vld [vmem:[%s3 + $0xc] sm:$0xf]
    %v1289 = vld [vmem:[%s3 + $0x10] sm:$0xf]
    %v1290 = vld [vmem:[%s3 + $0x14] sm:$0xf]
    %v1291 = vld [vmem:[%s3 + $0x18] sm:$0xf]
    %v1292 = vld [vmem:[%s3 + $0x1c] sm:$0xf]
    %v1293 = vld [vmem:[%s3 + $0x20] sm:$0xf]
    %v1294 = vld [vmem:[%s3 + $0x24] sm:$0xf]
    %v1295 = vld [vmem:[%s3 + $0x28] sm:$0xf]
    %v1296 = vld [vmem:[%s3 + $0x2c] sm:$0xf]
    %v1297 = vld [vmem:[%s3 + $0x30] sm:$0xf]
    %v1298 = vld [vmem:[%s3 + $0x34] sm:$0xf]
    %v1299 = vld [vmem:[%s3 + $0x38] sm:$0xf]
    %v1300 = vld [vmem:[%s3 + $0x3c] sm:$0xf]
    %v1301 = vld [vmem:[%s4] sm:$0x1]
    %v1303 = vlaneseq
    %v1304 = vshrl.u32 %v1303, 7
    %v1305 = vsub.s32 0, %v1304
    %v1306 = vrot.slane %v1301, %v1305
    %v1310 = vunpack.c.l.b16 %v1283
    %v1311 = vunpack.c.l.b16 %v1284
    %v1312 = vpack.c.b16 %v1311, %v1310
    %v1330 = vunpack.c.l.b16 %v1285
    %v1331 = vunpack.c.l.b16 %v1286
    %v1332 = vunpack.c.l.b16 %v1287
    %v1333 = vunpack.c.l.b16 %v1288
    %v1334 = vunpack.c.l.b16 %v1289
    %v1335 = vunpack.c.l.b16 %v1290
    %v1336 = vunpack.c.l.b16 %v1291
    %v1337 = vunpack.c.l.b16 %v1292
    %v1338 = vunpack.c.l.b16 %v1293
    %v1339 = vunpack.c.l.b16 %v1294
    %v1340 = vunpack.c.l.b16 %v1295
    %v1341 = vunpack.c.l.b16 %v1296
    %v1342 = vunpack.c.l.b16 %v1297
    %v1343 = vunpack.c.l.b16 %v1298
    %v1344 = vunpack.c.l.b16 %v1299
    %v1345 = vunpack.c.l.b16 %v1300
    %v1346 = vpack.c.b16 %v1331, %v1330
    %v1347 = vpack.c.b16 %v1333, %v1332
    %v1348 = vpack.c.b16 %v1335, %v1334
    %v1349 = vpack.c.b16 %v1337, %v1336
    %v1350 = vpack.c.b16 %v1339, %v1338
    %v1351 = vpack.c.b16 %v1341, %v1340
    %v1352 = vpack.c.b16 %v1343, %v1342
    %v1353 = vpack.c.b16 %v1345, %v1344
    %1362 = vmatprep.subr.bf16.mxu0 0
    %1363 = vmatpush1.bf16.msra.mxu0 %v1346
    %1364 = vmatprep.subr.bf16.mxu0 0
    %1365 = vmatpush1.bf16.msra.mxu0 %v1347
    %1366 = vmatprep.subr.bf16.mxu0 0
    %1367 = vmatpush1.bf16.msra.mxu0 %v1348
    %1368 = vmatprep.subr.bf16.mxu0 0
    %1369 = vmatpush1.bf16.msra.mxu0 %v1349
    %1370 = vmatprep.subr.bf16.mxu0 0
    %1371 = vmatpush1.bf16.msra.mxu0 %v1350
    %1372 = vmatprep.subr.bf16.mxu0 0
    %1373 = vmatpush1.bf16.msra.mxu0 %v1351
    %1374 = vmatprep.subr.bf16.mxu0 0
    %1375 = vmatpush1.bf16.msra.mxu0 %v1352
    %1376 = vmatprep.subr.bf16.mxu0 0
    %1377 = vmatpush1.bf16.msra.mxu0 %v1353
    %1378 = vmatprep.subr.bf16.mxu0 0
    %1379 = vmatpush1.bf16.msra.mxu0 0
    %1380 = vmatprep.subr.bf16.mxu0 0
    %1381 = vmatpush1.bf16.msra.mxu0 0
    %1382 = vmatprep.subr.bf16.mxu0 0
    %1383 = vmatpush1.bf16.msra.mxu0 0
    %1384 = vmatprep.subr.bf16.mxu0 0
    %1385 = vmatpush1.bf16.msra.mxu0 0
    %1386 = vmatprep.subr.bf16.mxu0 0
    %1387 = vmatpush1.bf16.msra.mxu0 0
    %1388 = vmatprep.subr.bf16.mxu0 0
    %1389 = vmatpush1.bf16.msra.mxu0 0
    %1390 = vmatprep.subr.bf16.mxu0 0
    %1391 = vmatpush1.bf16.msra.mxu0 0
    %1392 = vmatprep.subr.bf16.mxu0 0
    %1393 = vmatpush1.bf16.msra.mxu0 0
    %1394 = vmatprep.mubr.bf16.mxu0 0
    %1395 = vmatmul.mubr.bf16.gmra.mrb[0].mxu0 %v1312
    %v1396 = vpop.f32.mrb[0].mxu0
    %v1397 = vadd.f32 %v1306, %v1396
    %v1398 = vpop.f32.mrb[0].mxu0
    %v1399 = vpop.f32.mrb[0].mxu0
    %v1400 = vadd.f32 %v1306, %v1399
    %v1401 = vpop.f32.mrb[0].mxu0
    %1402 = vdwg.mxu0
    %v1403 = vadd.f32 %v34, %v1397
    %v1404 = vadd.f32 %v35, %v1400
    %v1405 = vrot.slane %v44, 2
    %v1406 = vrot.slane %v45, 2
    %v1407 = vrot.slane %v44, 3
    %v1408 = vrot.slane %v45, 3
    %1409 = vadd.xlane.f32.xlu0 %v1403
    %v1410 = vpop.xlane.xlu0 %1409
    %1411 = vadd.xlane.f32.xlu0 %v1404
    %v1412 = vpop.xlane.xlu0 %1411
    %v1413 = vmul.f32 %v1410, %v52
    %v1414 = vmul.f32 %v1412, %v52
    %v1415 = vsub.f32 %v1403, %v1413
    %v1416 = vsub.f32 %v1404, %v1414
    %v1417 = vmul.f32 %v1415, %v1415
    %v1418 = vmul.f32 %v1416, %v1416
    %1419 = vadd.xlane.f32.xlu0 %v1417
    %v1420 = vpop.xlane.xlu0 %1419
    %1421 = vadd.xlane.f32.xlu0 %v1418
    %v1422 = vpop.xlane.xlu0 %1421
    %v1423 = vmul.f32 %v1420, 0.007874016
    %v1424 = vmul.f32 %v1422, 0.007874016
    %v1425 = vrsqrt.pop %v1423
    %v1426 = vmul.f32 %v1423, %v1425
    %vm1427 = vcmp.eq.f32.partialorder %v1423, inf
    %v1428 = vsel %vm1427, %v1423, %v1426
    %vm1429 = vcmp.eq.f32.partialorder %v1423, 0.0
    %v1430 = vand.u32 %v1423, 2147483648
    %v1431 = vsel %vm1429, %v1430, %v1428
    %v1432 = vrsqrt.pop %v1424
    %v1433 = vmul.f32 %v1424, %v1432
    %vm1434 = vcmp.eq.f32.partialorder %v1424, inf
    %v1435 = vsel %vm1434, %v1424, %v1433
    %vm1436 = vcmp.eq.f32.partialorder %v1424, 0.0
    %v1437 = vand.u32 %v1424, 2147483648
    %v1438 = vsel %vm1436, %v1437, %v1435
    %v1439 = vadd.f32 %v1431, 1e-06
    %v1440 = vadd.f32 %v1438, 1e-06
    %v1441 = vrcp.pop %v1439
    %v1442 = vrcp.pop %v1440
    %v1443 = vmul.f32 %v1415, %v1441
    %v1444 = vmul.f32 %v1416, %v1442
    %v1445 = vlaneseq
    %v1446 = vshrl.u32 %v1445, 7
    %v1447 = vsub.s32 0, %v1446
    %v1448 = vrot.slane %v1405, %v1447
    %v1449 = vlaneseq
    %v1450 = vshrl.u32 %v1449, 7
    %v1451 = vsub.s32 0, %v1450
    %v1452 = vrot.slane %v1406, %v1451
    %v1455 = vmul.f32 %v1448, %v1443
    %v1456 = vmul.f32 %v1452, %v1444
    %v1457 = vlaneseq
    %v1458 = vshrl.u32 %v1457, 7
    %v1459 = vsub.s32 0, %v1458
    %v1460 = vrot.slane %v1407, %v1459
    %v1461 = vlaneseq
    %v1462 = vshrl.u32 %v1461, 7
    %v1463 = vsub.s32 0, %v1462
    %v1464 = vrot.slane %v1408, %v1463
    %v1467 = vadd.f32 %v1455, %v1460
    %v1468 = vadd.f32 %v1456, %v1464
    %v1469 = vpack.c.bf16 %v1468, %v1467
    %v1470 = vld [vmem:[%s5] sm:$0xff]
    %v1471 = vld [vmem:[%s5 + $0x8] sm:$0xff]
    %v1472 = vld [vmem:[%s5 + $0x10] sm:$0xff]
    %v1473 = vld [vmem:[%s5 + $0x18] sm:$0xff]
    %v1474 = vld [vmem:[%s5 + $0x20] sm:$0xff]
    %v1475 = vld [vmem:[%s5 + $0x28] sm:$0xff]
    %v1476 = vld [vmem:[%s5 + $0x30] sm:$0xff]
    %v1477 = vld [vmem:[%s5 + $0x38] sm:$0xff]
    %v1478 = vld [vmem:[%s5 + $0x40] sm:$0xff]
    %v1479 = vld [vmem:[%s5 + $0x48] sm:$0xff]
    %v1480 = vld [vmem:[%s5 + $0x50] sm:$0xff]
    %v1481 = vld [vmem:[%s5 + $0x58] sm:$0xff]
    %v1482 = vld [vmem:[%s5 + $0x60] sm:$0xff]
    %v1483 = vld [vmem:[%s5 + $0x68] sm:$0xff]
    %v1484 = vld [vmem:[%s5 + $0x70] sm:$0xff]
    %v1485 = vld [vmem:[%s5 + $0x78] sm:$0xff]
    %v1486 = vld [vmem:[%s5 + $0x80] sm:$0xff]
    %v1487 = vld [vmem:[%s5 + $0x88] sm:$0xff]
    %v1488 = vld [vmem:[%s5 + $0x90] sm:$0xff]
    %v1489 = vld [vmem:[%s5 + $0x98] sm:$0xff]
    %v1490 = vld [vmem:[%s5 + $0xa0] sm:$0xff]
    %v1491 = vld [vmem:[%s5 + $0xa8] sm:$0xff]
    %v1492 = vld [vmem:[%s5 + $0xb0] sm:$0xff]
    %v1493 = vld [vmem:[%s5 + $0xb8] sm:$0xff]
    %v1494 = vld [vmem:[%s5 + $0xc0] sm:$0xff]
    %v1495 = vld [vmem:[%s5 + $0xc8] sm:$0xff]
    %v1496 = vld [vmem:[%s5 + $0xd0] sm:$0xff]
    %v1497 = vld [vmem:[%s5 + $0xd8] sm:$0xff]
    %v1498 = vld [vmem:[%s5 + $0xe0] sm:$0xff]
    %v1499 = vld [vmem:[%s5 + $0xe8] sm:$0xff]
    %v1500 = vld [vmem:[%s5 + $0xf0] sm:$0xff]
    %v1501 = vld [vmem:[%s5 + $0xf8] sm:$0xff]
    %v1502 = vld [vmem:[%s6] sm:$0xf]
    %v1504 = vlaneseq
    %v1505 = vshrl.u32 %v1504, 7
    %v1506 = vsub.s32 0, %v1505
    %v1507 = vrot.slane %v1502, %v1506
    %v1508 = vlaneseq
    %v1509 = vshrl.u32 %v1508, 7
    %v1510 = vsub.s32 1, %v1509
    %v1511 = vrot.slane %v1502, %v1510
    %v1512 = vlaneseq
    %v1513 = vshrl.u32 %v1512, 7
    %v1514 = vsub.s32 2, %v1513
    %v1515 = vrot.slane %v1502, %v1514
    %v1516 = vlaneseq
    %v1517 = vshrl.u32 %v1516, 7
    %v1518 = vsub.s32 3, %v1517
    %v1519 = vrot.slane %v1502, %v1518
    %v1556 = vunpack.c.l.b16 %v1470
    %v1557 = vunpack.c.h.b16 %v1470
    %v1558 = vunpack.c.l.b16 %v1471
    %v1559 = vunpack.c.h.b16 %v1471
    %v1560 = vunpack.c.l.b16 %v1472
    %v1561 = vunpack.c.h.b16 %v1472
    %v1562 = vunpack.c.l.b16 %v1473
    %v1563 = vunpack.c.h.b16 %v1473
    %v1564 = vunpack.c.l.b16 %v1474
    %v1565 = vunpack.c.h.b16 %v1474
    %v1566 = vunpack.c.l.b16 %v1475
    %v1567 = vunpack.c.h.b16 %v1475
    %v1568 = vunpack.c.l.b16 %v1476
    %v1569 = vunpack.c.h.b16 %v1476
    %v1570 = vunpack.c.l.b16 %v1477
    %v1571 = vunpack.c.h.b16 %v1477
    %v1572 = vunpack.c.l.b16 %v1478
    %v1573 = vunpack.c.h.b16 %v1478
    %v1574 = vunpack.c.l.b16 %v1479
    %v1575 = vunpack.c.h.b16 %v1479
    %v1576 = vunpack.c.l.b16 %v1480
    %v1577 = vunpack.c.h.b16 %v1480
    %v1578 = vunpack.c.l.b16 %v1481
    %v1579 = vunpack.c.h.b16 %v1481
    %v1580 = vunpack.c.l.b16 %v1482
    %v1581 = vunpack.c.h.b16 %v1482
    %v1582 = vunpack.c.l.b16 %v1483
    %v1583 = vunpack.c.h.b16 %v1483
    %v1584 = vunpack.c.l.b16 %v1484
    %v1585 = vunpack.c.h.b16 %v1484
    %v1586 = vunpack.c.l.b16 %v1485
    %v1587 = vunpack.c.h.b16 %v1485
    %v1588 = vunpack.c.l.b16 %v1486
    %v1589 = vunpack.c.h.b16 %v1486
    %v1590 = vunpack.c.l.b16 %v1487
    %v1591 = vunpack.c.h.b16 %v1487
    %v1592 = vunpack.c.l.b16 %v1488
    %v1593 = vunpack.c.h.b16 %v1488
    %v1594 = vunpack.c.l.b16 %v1489
    %v1595 = vunpack.c.h.b16 %v1489
    %v1596 = vunpack.c.l.b16 %v1490
    %v1597 = vunpack.c.h.b16 %v1490
    %v1598 = vunpack.c.l.b16 %v1491
    %v1599 = vunpack.c.h.b16 %v1491
    %v1600 = vunpack.c.l.b16 %v1492
    %v1601 = vunpack.c.h.b16 %v1492
    %v1602 = vunpack.c.l.b16 %v1493
    %v1603 = vunpack.c.h.b16 %v1493
    %v1604 = vunpack.c.l.b16 %v1494
    %v1605 = vunpack.c.h.b16 %v1494
    %v1606 = vunpack.c.l.b16 %v1495
    %v1607 = vunpack.c.h.b16 %v1495
    %v1608 = vunpack.c.l.b16 %v1496
    %v1609 = vunpack.c.h.b16 %v1496
    %v1610 = vunpack.c.l.b16 %v1497
    %v1611 = vunpack.c.h.b16 %v1497
    %v1612 = vunpack.c.l.b16 %v1498
    %v1613 = vunpack.c.h.b16 %v1498
    %v1614 = vunpack.c.l.b16 %v1499
    %v1615 = vunpack.c.h.b16 %v1499
    %v1616 = vunpack.c.l.b16 %v1500
    %v1617 = vunpack.c.h.b16 %v1500
    %v1618 = vunpack.c.l.b16 %v1501
    %v1619 = vunpack.c.h.b16 %v1501
    %v1620 = vpack.c.b16 %v1560, %v1556
    %v1621 = vpack.c.b16 %v1561, %v1557
    %v1622 = vpack.c.b16 %v1562, %v1558
    %v1623 = vpack.c.b16 %v1563, %v1559
    %v1624 = vpack.c.b16 %v1568, %v1564
    %v1625 = vpack.c.b16 %v1569, %v1565
    %v1626 = vpack.c.b16 %v1570, %v1566
    %v1627 = vpack.c.b16 %v1571, %v1567
    %v1628 = vpack.c.b16 %v1576, %v1572
    %v1629 = vpack.c.b16 %v1577, %v1573
    %v1630 = vpack.c.b16 %v1578, %v1574
    %v1631 = vpack.c.b16 %v1579, %v1575
    %v1632 = vpack.c.b16 %v1584, %v1580
    %v1633 = vpack.c.b16 %v1585, %v1581
    %v1634 = vpack.c.b16 %v1586, %v1582
    %v1635 = vpack.c.b16 %v1587, %v1583
    %v1636 = vpack.c.b16 %v1592, %v1588
    %v1637 = vpack.c.b16 %v1593, %v1589
    %v1638 = vpack.c.b16 %v1594, %v1590
    %v1639 = vpack.c.b16 %v1595, %v1591
    %v1640 = vpack.c.b16 %v1600, %v1596
    %v1641 = vpack.c.b16 %v1601, %v1597
    %v1642 = vpack.c.b16 %v1602, %v1598
    %v1643 = vpack.c.b16 %v1603, %v1599
    %v1644 = vpack.c.b16 %v1608, %v1604
    %v1645 = vpack.c.b16 %v1609, %v1605
    %v1646 = vpack.c.b16 %v1610, %v1606
    %v1647 = vpack.c.b16 %v1611, %v1607
    %v1648 = vpack.c.b16 %v1616, %v1612
    %v1649 = vpack.c.b16 %v1617, %v1613
    %v1650 = vpack.c.b16 %v1618, %v1614
    %v1651 = vpack.c.b16 %v1619, %v1615
    %1684 = vmatprep.subr.bf16.mxu0 %v1621
    %1685 = vmatpush1.bf16.msra.mxu0 %v1620
    %1686 = vmatprep.subr.bf16.mxu0 %v1625
    %1687 = vmatpush1.bf16.msra.mxu0 %v1624
    %1688 = vmatprep.subr.bf16.mxu0 %v1629
    %1689 = vmatpush1.bf16.msra.mxu0 %v1628
    %1690 = vmatprep.subr.bf16.mxu0 %v1633
    %1691 = vmatpush1.bf16.msra.mxu0 %v1632
    %1692 = vmatprep.subr.bf16.mxu0 %v1637
    %1693 = vmatpush1.bf16.msra.mxu0 %v1636
    %1694 = vmatprep.subr.bf16.mxu0 %v1641
    %1695 = vmatpush1.bf16.msra.mxu0 %v1640
    %1696 = vmatprep.subr.bf16.mxu0 %v1645
    %1697 = vmatpush1.bf16.msra.mxu0 %v1644
    %1698 = vmatprep.subr.bf16.mxu0 %v1649
    %1699 = vmatpush1.bf16.msra.mxu0 %v1648
    %1700 = vmatprep.subr.bf16.mxu0 0
    %1701 = vmatpush1.bf16.msra.mxu0 0
    %1702 = vmatprep.subr.bf16.mxu0 0
    %1703 = vmatpush1.bf16.msra.mxu0 0
    %1704 = vmatprep.subr.bf16.mxu0 0
    %1705 = vmatpush1.bf16.msra.mxu0 0
    %1706 = vmatprep.subr.bf16.mxu0 0
    %1707 = vmatpush1.bf16.msra.mxu0 0
    %1708 = vmatprep.subr.bf16.mxu0 0
    %1709 = vmatpush1.bf16.msra.mxu0 0
    %1710 = vmatprep.subr.bf16.mxu0 0
    %1711 = vmatpush1.bf16.msra.mxu0 0
    %1712 = vmatprep.subr.bf16.mxu0 0
    %1713 = vmatpush1.bf16.msra.mxu0 0
    %1714 = vmatprep.subr.bf16.mxu0 0
    %1715 = vmatpush1.bf16.msra.mxu0 0
    %1716 = vmatprep.mubr.bf16.mxu0 0
    %1717 = vmatmul.mubr.bf16.gmra.mrb[0].mxu0 %v1469
    %v1718 = vpop.f32.mrb[0].mxu0
    %v1719 = vadd.f32 %v1507, %v1718
    %v1720 = vpop.f32.mrb[0].mxu0
    %v1721 = vadd.f32 %v1511, %v1720
    %v1722 = vpop.f32.mrb[0].mxu0
    %v1723 = vadd.f32 %v1507, %v1722
    %v1724 = vpop.f32.mrb[0].mxu0
    %v1725 = vadd.f32 %v1511, %v1724
    %1726 = vdwg.mxu0
    %1727 = vmatprep.subr.bf16.mxu0 %v1623
    %1728 = vmatpush1.bf16.msra.mxu0 %v1622
    %1729 = vmatprep.subr.bf16.mxu0 %v1627
    %1730 = vmatpush1.bf16.msra.mxu0 %v1626
    %1731 = vmatprep.subr.bf16.mxu0 %v1631
    %1732 = vmatpush1.bf16.msra.mxu0 %v1630
    %1733 = vmatprep.subr.bf16.mxu0 %v1635
    %1734 = vmatpush1.bf16.msra.mxu0 %v1634
    %1735 = vmatprep.subr.bf16.mxu0 %v1639
    %1736 = vmatpush1.bf16.msra.mxu0 %v1638
    %1737 = vmatprep.subr.bf16.mxu0 %v1643
    %1738 = vmatpush1.bf16.msra.mxu0 %v1642
    %1739 = vmatprep.subr.bf16.mxu0 %v1647
    %1740 = vmatpush1.bf16.msra.mxu0 %v1646
    %1741 = vmatprep.subr.bf16.mxu0 %v1651
    %1742 = vmatpush1.bf16.msra.mxu0 %v1650
    %1743 = vmatprep.subr.bf16.mxu0 0
    %1744 = vmatpush1.bf16.msra.mxu0 0
    %1745 = vmatprep.subr.bf16.mxu0 0
    %1746 = vmatpush1.bf16.msra.mxu0 0
    %1747 = vmatprep.subr.bf16.mxu0 0
    %1748 = vmatpush1.bf16.msra.mxu0 0
    %1749 = vmatprep.subr.bf16.mxu0 0
    %1750 = vmatpush1.bf16.msra.mxu0 0
    %1751 = vmatprep.subr.bf16.mxu0 0
    %1752 = vmatpush1.bf16.msra.mxu0 0
    %1753 = vmatprep.subr.bf16.mxu0 0
    %1754 = vmatpush1.bf16.msra.mxu0 0
    %1755 = vmatprep.subr.bf16.mxu0 0
    %1756 = vmatpush1.bf16.msra.mxu0 0
    %1757 = vmatprep.subr.bf16.mxu0 0
    %1758 = vmatpush1.bf16.msra.mxu0 0
    %1759 = vmatprep.mubr.bf16.mxu0 0
    %1760 = vmatmul.mubr.bf16.gmra.mrb[0].mxu0 %v1469
    %v1761 = vpop.f32.mrb[0].mxu0
    %v1762 = vadd.f32 %v1515, %v1761
    %v1763 = vpop.f32.mrb[0].mxu0
    %v1764 = vadd.f32 %v1519, %v1763
    %v1765 = vpop.f32.mrb[0].mxu0
    %v1766 = vadd.f32 %v1515, %v1765
    %v1767 = vpop.f32.mrb[0].mxu0
    %v1768 = vadd.f32 %v1519, %v1767
    %1769 = vdwg.mxu0
    %v1770 = vmul.f32 %v1719, %v1719
    %v1771 = vmul.f32 %v1721, %v1721
    %v1772 = vmul.f32 %v1762, %v1762
    %v1773 = vmul.f32 %v1764, %v1764
    %v1774 = vmul.f32 %v1723, %v1723
    %v1775 = vmul.f32 %v1725, %v1725
    %v1776 = vmul.f32 %v1766, %v1766
    %v1777 = vmul.f32 %v1768, %v1768
    %v1778 = vmul.f32 %v1719, %v1770
    %v1779 = vmul.f32 %v1721, %v1771
    %v1780 = vmul.f32 %v1762, %v1772
    %v1781 = vmul.f32 %v1764, %v1773
    %v1782 = vmul.f32 %v1723, %v1774
    %v1783 = vmul.f32 %v1725, %v1775
    %v1784 = vmul.f32 %v1766, %v1776
    %v1785 = vmul.f32 %v1768, %v1777
    %v1786 = vmul.f32 %v1778, 0.044715
    %v1787 = vmul.f32 %v1779, 0.044715
    %v1788 = vmul.f32 %v1780, 0.044715
    %v1789 = vmul.f32 %v1781, 0.044715
    %v1790 = vmul.f32 %v1782, 0.044715
    %v1791 = vmul.f32 %v1783, 0.044715
    %v1792 = vmul.f32 %v1784, 0.044715
    %v1793 = vmul.f32 %v1785, 0.044715
    %v1794 = vadd.f32 %v1719, %v1786
    %v1795 = vadd.f32 %v1721, %v1787
    %v1796 = vadd.f32 %v1762, %v1788
    %v1797 = vadd.f32 %v1764, %v1789
    %v1798 = vadd.f32 %v1723, %v1790
    %v1799 = vadd.f32 %v1725, %v1791
    %v1800 = vadd.f32 %v1766, %v1792
    %v1801 = vadd.f32 %v1768, %v1793
    %v1802 = vmul.f32 %v1794, 0.7978846
    %v1803 = vmul.f32 %v1795, 0.7978846
    %v1804 = vmul.f32 %v1796, 0.7978846
    %v1805 = vmul.f32 %v1797, 0.7978846
    %v1806 = vmul.f32 %v1798, 0.7978846
    %v1807 = vmul.f32 %v1799, 0.7978846
    %v1808 = vmul.f32 %v1800, 0.7978846
    %v1809 = vmul.f32 %v1801, 0.7978846
    %v1810 = vtanh.pop %v1802
    %v1811 = vtanh.pop %v1803
    %v1812 = vtanh.pop %v1804
    %v1813 = vtanh.pop %v1805
    %v1814 = vtanh.pop %v1806
    %v1815 = vtanh.pop %v1807
    %v1816 = vtanh.pop %v1808
    %v1817 = vtanh.pop %v1809
    %v1818 = vadd.f32 %v1810, 1.0
    %v1819 = vadd.f32 %v1811, 1.0
    %v1820 = vadd.f32 %v1812, 1.0
    %v1821 = vadd.f32 %v1813, 1.0
    %v1822 = vadd.f32 %v1814, 1.0
    %v1823 = vadd.f32 %v1815, 1.0
    %v1824 = vadd.f32 %v1816, 1.0
    %v1825 = vadd.f32 %v1817, 1.0
    %v1826 = vmul.f32 %v1818, 0.5
    %v1827 = vmul.f32 %v1819, 0.5
    %v1828 = vmul.f32 %v1820, 0.5
    %v1829 = vmul.f32 %v1821, 0.5
    %v1830 = vmul.f32 %v1822, 0.5
    %v1831 = vmul.f32 %v1823, 0.5
    %v1832 = vmul.f32 %v1824, 0.5
    %v1833 = vmul.f32 %v1825, 0.5
    %v1834 = vmul.f32 %v1719, %v1826
    %v1835 = vmul.f32 %v1721, %v1827
    %v1836 = vmul.f32 %v1762, %v1828
    %v1837 = vmul.f32 %v1764, %v1829
    %v1838 = vmul.f32 %v1723, %v1830
    %v1839 = vmul.f32 %v1725, %v1831
    %v1840 = vmul.f32 %v1766, %v1832
    %v1841 = vmul.f32 %v1768, %v1833
    %v1842 = vpack.c.bf16 %v1838, %v1834
    %v1843 = vpack.c.bf16 %v1839, %v1835
    %v1844 = vpack.c.bf16 %v1840, %v1836
    %v1845 = vpack.c.bf16 %v1841, %v1837
    %v1846 = vld [vmem:[%s7] sm:$0xf]
    %v1847 = vld [vmem:[%s7 + $0x4] sm:$0xf]
    %v1848 = vld [vmem:[%s7 + $0x8] sm:$0xf]
    %v1849 = vld [vmem:[%s7 + $0xc] sm:$0xf]
    %v1850 = vld [vmem:[%s7 + $0x10] sm:$0xf]
    %v1851 = vld [vmem:[%s7 + $0x14] sm:$0xf]
    %v1852 = vld [vmem:[%s7 + $0x18] sm:$0xf]
    %v1853 = vld [vmem:[%s7 + $0x1c] sm:$0xf]
    %v1854 = vld [vmem:[%s7 + $0x20] sm:$0xf]
    %v1855 = vld [vmem:[%s7 + $0x24] sm:$0xf]
    %v1856 = vld [vmem:[%s7 + $0x28] sm:$0xf]
    %v1857 = vld [vmem:[%s7 + $0x2c] sm:$0xf]
    %v1858 = vld [vmem:[%s7 + $0x30] sm:$0xf]
    %v1859 = vld [vmem:[%s7 + $0x34] sm:$0xf]
    %v1860 = vld [vmem:[%s7 + $0x38] sm:$0xf]
    %v1861 = vld [vmem:[%s7 + $0x3c] sm:$0xf]
    %v1862 = vld [vmem:[%s7 + $0x40] sm:$0xf]
    %v1863 = vld [vmem:[%s7 + $0x44] sm:$0xf]
    %v1864 = vld [vmem:[%s7 + $0x48] sm:$0xf]
    %v1865 = vld [vmem:[%s7 + $0x4c] sm:$0xf]
    %v1866 = vld [vmem:[%s7 + $0x50] sm:$0xf]
    %v1867 = vld [vmem:[%s7 + $0x54] sm:$0xf]
    %v1868 = vld [vmem:[%s7 + $0x58] sm:$0xf]
    %v1869 = vld [vmem:[%s7 + $0x5c] sm:$0xf]
    %v1870 = vld [vmem:[%s7 + $0x60] sm:$0xf]
    %v1871 = vld [vmem:[%s7 + $0x64] sm:$0xf]
    %v1872 = vld [vmem:[%s7 + $0x68] sm:$0xf]
    %v1873 = vld [vmem:[%s7 + $0x6c] sm:$0xf]
    %v1874 = vld [vmem:[%s7 + $0x70] sm:$0xf]
    %v1875 = vld [vmem:[%s7 + $0x74] sm:$0xf]
    %v1876 = vld [vmem:[%s7 + $0x78] sm:$0xf]
    %v1877 = vld [vmem:[%s7 + $0x7c] sm:$0xf]
    %v1878 = vld [vmem:[%s7 + $0x80] sm:$0xf]
    %v1879 = vld [vmem:[%s7 + $0x84] sm:$0xf]
    %v1880 = vld [vmem:[%s7 + $0x88] sm:$0xf]
    %v1881 = vld [vmem:[%s7 + $0x8c] sm:$0xf]
    %v1882 = vld [vmem:[%s7 + $0x90] sm:$0xf]
    %v1883 = vld [vmem:[%s7 + $0x94] sm:$0xf]
    %v1884 = vld [vmem:[%s7 + $0x98] sm:$0xf]
    %v1885 = vld [vmem:[%s7 + $0x9c] sm:$0xf]
    %v1886 = vld [vmem:[%s7 + $0xa0] sm:$0xf]
    %v1887 = vld [vmem:[%s7 + $0xa4] sm:$0xf]
    %v1888 = vld [vmem:[%s7 + $0xa8] sm:$0xf]
    %v1889 = vld [vmem:[%s7 + $0xac] sm:$0xf]
    %v1890 = vld [vmem:[%s7 + $0xb0] sm:$0xf]
    %v1891 = vld [vmem:[%s7 + $0xb4] sm:$0xf]
    %v1892 = vld [vmem:[%s7 + $0xb8] sm:$0xf]
    %v1893 = vld [vmem:[%s7 + $0xbc] sm:$0xf]
    %v1894 = vld [vmem:[%s7 + $0xc0] sm:$0xf]
    %v1895 = vld [vmem:[%s7 + $0xc4] sm:$0xf]
    %v1896 = vld [vmem:[%s7 + $0xc8] sm:$0xf]
    %v1897 = vld [vmem:[%s7 + $0xcc] sm:$0xf]
    %v1898 = vld [vmem:[%s7 + $0xd0] sm:$0xf]
    %v1899 = vld [vmem:[%s7 + $0xd4] sm:$0xf]
    %v1900 = vld [vmem:[%s7 + $0xd8] sm:$0xf]
    %v1901 = vld [vmem:[%s7 + $0xdc] sm:$0xf]
    %v1902 = vld [vmem:[%s7 + $0xe0] sm:$0xf]
    %v1903 = vld [vmem:[%s7 + $0xe4] sm:$0xf]
    %v1904 = vld [vmem:[%s7 + $0xe8] sm:$0xf]
    %v1905 = vld [vmem:[%s7 + $0xec] sm:$0xf]
    %v1906 = vld [vmem:[%s7 + $0xf0] sm:$0xf]
    %v1907 = vld [vmem:[%s7 + $0xf4] sm:$0xf]
    %v1908 = vld [vmem:[%s7 + $0xf8] sm:$0xf]
    %v1909 = vld [vmem:[%s7 + $0xfc] sm:$0xf]
    %v1910 = vld [vmem:[%s8] sm:$0x1]
    %v1912 = vlaneseq
    %v1913 = vshrl.u32 %v1912, 7
    %v1914 = vsub.s32 0, %v1913
    %v1915 = vrot.slane %v1910, %v1914
    %v1981 = vunpack.c.l.b16 %v1846
    %v1982 = vunpack.c.l.b16 %v1847
    %v1983 = vunpack.c.l.b16 %v1848
    %v1984 = vunpack.c.l.b16 %v1849
    %v1985 = vunpack.c.l.b16 %v1850
    %v1986 = vunpack.c.l.b16 %v1851
    %v1987 = vunpack.c.l.b16 %v1852
    %v1988 = vunpack.c.l.b16 %v1853
    %v1989 = vunpack.c.l.b16 %v1854
    %v1990 = vunpack.c.l.b16 %v1855
    %v1991 = vunpack.c.l.b16 %v1856
    %v1992 = vunpack.c.l.b16 %v1857
    %v1993 = vunpack.c.l.b16 %v1858
    %v1994 = vunpack.c.l.b16 %v1859
    %v1995 = vunpack.c.l.b16 %v1860
    %v1996 = vunpack.c.l.b16 %v1861
    %v1997 = vunpack.c.l.b16 %v1862
    %v1998 = vunpack.c.l.b16 %v1863
    %v1999 = vunpack.c.l.b16 %v1864
    %v2000 = vunpack.c.l.b16 %v1865
    %v2001 = vunpack.c.l.b16 %v1866
    %v2002 = vunpack.c.l.b16 %v1867
    %v2003 = vunpack.c.l.b16 %v1868
    %v2004 = vunpack.c.l.b16 %v1869
    %v2005 = vunpack.c.l.b16 %v1870
    %v2006 = vunpack.c.l.b16 %v1871
    %v2007 = vunpack.c.l.b16 %v1872
    %v2008 = vunpack.c.l.b16 %v1873
    %v2009 = vunpack.c.l.b16 %v1874
    %v2010 = vunpack.c.l.b16 %v1875
    %v2011 = vunpack.c.l.b16 %v1876
    %v2012 = vunpack.c.l.b16 %v1877
    %v2013 = vunpack.c.l.b16 %v1878
    %v2014 = vunpack.c.l.b16 %v1879
    %v2015 = vunpack.c.l.b16 %v1880
    %v2016 = vunpack.c.l.b16 %v1881
    %v2017 = vunpack.c.l.b16 %v1882
    %v2018 = vunpack.c.l.b16 %v1883
    %v2019 = vunpack.c.l.b16 %v1884
    %v2020 = vunpack.c.l.b16 %v1885
    %v2021 = vunpack.c.l.b16 %v1886
    %v2022 = vunpack.c.l.b16 %v1887
    %v2023 = vunpack.c.l.b16 %v1888
    %v2024 = vunpack.c.l.b16 %v1889
    %v2025 = vunpack.c.l.b16 %v1890
    %v2026 = vunpack.c.l.b16 %v1891
    %v2027 = vunpack.c.l.b16 %v1892
    %v2028 = vunpack.c.l.b16 %v1893
    %v2029 = vunpack.c.l.b16 %v1894
    %v2030 = vunpack.c.l.b16 %v1895
    %v2031 = vunpack.c.l.b16 %v1896
    %v2032 = vunpack.c.l.b16 %v1897
    %v2033 = vunpack.c.l.b16 %v1898
    %v2034 = vunpack.c.l.b16 %v1899
    %v2035 = vunpack.c.l.b16 %v1900
    %v2036 = vunpack.c.l.b16 %v1901
    %v2037 = vunpack.c.l.b16 %v1902
    %v2038 = vunpack.c.l.b16 %v1903
    %v2039 = vunpack.c.l.b16 %v1904
    %v2040 = vunpack.c.l.b16 %v1905
    %v2041 = vunpack.c.l.b16 %v1906
    %v2042 = vunpack.c.l.b16 %v1907
    %v2043 = vunpack.c.l.b16 %v1908
    %v2044 = vunpack.c.l.b16 %v1909
    %v2045 = vpack.c.b16 %v1982, %v1981
    %v2046 = vpack.c.b16 %v1984, %v1983
    %v2047 = vpack.c.b16 %v1986, %v1985
    %v2048 = vpack.c.b16 %v1988, %v1987
    %v2049 = vpack.c.b16 %v1990, %v1989
    %v2050 = vpack.c.b16 %v1992, %v1991
    %v2051 = vpack.c.b16 %v1994, %v1993
    %v2052 = vpack.c.b16 %v1996, %v1995
    %v2053 = vpack.c.b16 %v1998, %v1997
    %v2054 = vpack.c.b16 %v2000, %v1999
    %v2055 = vpack.c.b16 %v2002, %v2001
    %v2056 = vpack.c.b16 %v2004, %v2003
    %v2057 = vpack.c.b16 %v2006, %v2005
    %v2058 = vpack.c.b16 %v2008, %v2007
    %v2059 = vpack.c.b16 %v2010, %v2009
    %v2060 = vpack.c.b16 %v2012, %v2011
    %v2061 = vpack.c.b16 %v2014, %v2013
    %v2062 = vpack.c.b16 %v2016, %v2015
    %v2063 = vpack.c.b16 %v2018, %v2017
    %v2064 = vpack.c.b16 %v2020, %v2019
    %v2065 = vpack.c.b16 %v2022, %v2021
    %v2066 = vpack.c.b16 %v2024, %v2023
    %v2067 = vpack.c.b16 %v2026, %v2025
    %v2068 = vpack.c.b16 %v2028, %v2027
    %v2069 = vpack.c.b16 %v2030, %v2029
    %v2070 = vpack.c.b16 %v2032, %v2031
    %v2071 = vpack.c.b16 %v2034, %v2033
    %v2072 = vpack.c.b16 %v2036, %v2035
    %v2073 = vpack.c.b16 %v2038, %v2037
    %v2074 = vpack.c.b16 %v2040, %v2039
    %v2075 = vpack.c.b16 %v2042, %v2041
    %v2076 = vpack.c.b16 %v2044, %v2043
    %2109 = vmatprep.subr.bf16.mxu0 0
    %2110 = vmatpush1.bf16.msra.mxu0 %v2045
    %2111 = vmatprep.subr.bf16.mxu0 0
    %2112 = vmatpush1.bf16.msra.mxu0 %v2046
    %2113 = vmatprep.subr.bf16.mxu0 0
    %2114 = vmatpush1.bf16.msra.mxu0 %v2047
    %2115 = vmatprep.subr.bf16.mxu0 0
    %2116 = vmatpush1.bf16.msra.mxu0 %v2048
    %2117 = vmatprep.subr.bf16.mxu0 0
    %2118 = vmatpush1.bf16.msra.mxu0 %v2049
    %2119 = vmatprep.subr.bf16.mxu0 0
    %2120 = vmatpush1.bf16.msra.mxu0 %v2050
    %2121 = vmatprep.subr.bf16.mxu0 0
    %2122 = vmatpush1.bf16.msra.mxu0 %v2051
    %2123 = vmatprep.subr.bf16.mxu0 0
    %2124 = vmatpush1.bf16.msra.mxu0 %v2052
    %2125 = vmatprep.subr.bf16.mxu0 0
    %2126 = vmatpush1.bf16.msra.mxu0 %v2053
    %2127 = vmatprep.subr.bf16.mxu0 0
    %2128 = vmatpush1.bf16.msra.mxu0 %v2054
    %2129 = vmatprep.subr.bf16.mxu0 0
    %2130 = vmatpush1.bf16.msra.mxu0 %v2055
    %2131 = vmatprep.subr.bf16.mxu0 0
    %2132 = vmatpush1.bf16.msra.mxu0 %v2056
    %2133 = vmatprep.subr.bf16.mxu0 0
    %2134 = vmatpush1.bf16.msra.mxu0 %v2057
    %2135 = vmatprep.subr.bf16.mxu0 0
    %2136 = vmatpush1.bf16.msra.mxu0 %v2058
    %2137 = vmatprep.subr.bf16.mxu0 0
    %2138 = vmatpush1.bf16.msra.mxu0 %v2059
    %2139 = vmatprep.subr.bf16.mxu0 0
    %2140 = vmatpush1.bf16.msra.mxu0 %v2060
    %2141 = vmatprep.mubr.bf16.mxu0 %v1843
    %2142 = vmatmul.mubr.bf16.gmra.mrb[0].mxu0 %v1842
    %v2143 = vpop.f32.mrb[0].mxu0
    %v2144 = vadd.f32 %v1915, %v2143
    %v2145 = vpop.f32.mrb[0].mxu0
    %v2146 = vpop.f32.mrb[0].mxu0
    %v2147 = vadd.f32 %v1915, %v2146
    %v2148 = vpop.f32.mrb[0].mxu0
    %2149 = vdwg.mxu0
    %2150 = vmatprep.subr.bf16.mxu0 0
    %2151 = vmatpush1.bf16.msra.mxu0 %v2061
    %2152 = vmatprep.subr.bf16.mxu0 0
    %2153 = vmatpush1.bf16.msra.mxu0 %v2062
    %2154 = vmatprep.subr.bf16.mxu0 0
    %2155 = vmatpush1.bf16.msra.mxu0 %v2063
    %2156 = vmatprep.subr.bf16.mxu0 0
    %2157 = vmatpush1.bf16.msra.mxu0 %v2064
    %2158 = vmatprep.subr.bf16.mxu0 0
    %2159 = vmatpush1.bf16.msra.mxu0 %v2065
    %2160 = vmatprep.subr.bf16.mxu0 0
    %2161 = vmatpush1.bf16.msra.mxu0 %v2066
    %2162 = vmatprep.subr.bf16.mxu0 0
    %2163 = vmatpush1.bf16.msra.mxu0 %v2067
    %2164 = vmatprep.subr.bf16.mxu0 0
    %2165 = vmatpush1.bf16.msra.mxu0 %v2068
    %2166 = vmatprep.subr.bf16.mxu0 0
    %2167 = vmatpush1.bf16.msra.mxu0 %v2069
    %2168 = vmatprep.subr.bf16.mxu0 0
    %2169 = vmatpush1.bf16.msra.mxu0 %v2070
    %2170 = vmatprep.subr.bf16.mxu0 0
    %2171 = vmatpush1.bf16.msra.mxu0 %v2071
    %2172 = vmatprep.subr.bf16.mxu0 0
    %2173 = vmatpush1.bf16.msra.mxu0 %v2072
    %2174 = vmatprep.subr.bf16.mxu0 0
    %2175 = vmatpush1.bf16.msra.mxu0 %v2073
    %2176 = vmatprep.subr.bf16.mxu0 0
    %2177 = vmatpush1.bf16.msra.mxu0 %v2074
    %2178 = vmatprep.subr.bf16.mxu0 0
    %2179 = vmatpush1.bf16.msra.mxu0 %v2075
    %2180 = vmatprep.subr.bf16.mxu0 0
    %2181 = vmatpush1.bf16.msra.mxu0 %v2076
    %2182 = vmatprep.mubr.bf16.mxu0 %v1845
    %2183 = vmatmul.mubr.bf16.gmra.mrb[0].mxu0 %v1844
    %v2184 = vpop.f32.mrb[0].mxu0
    %v2185 = vadd.f32 %v2144, %v2184
    %v2186 = vpop.f32.mrb[0].mxu0
    %v2187 = vpop.f32.mrb[0].mxu0
    %v2188 = vadd.f32 %v2147, %v2187
    %v2189 = vpop.f32.mrb[0].mxu0
    %2190 = vdwg.mxu0
    %v2191 = vadd.f32 %v1403, %v2185
    %v2192 = vadd.f32 %v1404, %v2188
    %2193 = vst [vmem:[#allocation2] sm:$0xff] %v2191
    %2194 = vst [vmem:[#allocation2 + $0x8] sm:$0xff] %v2192
    // Predicated region
    $region38: #{block_adaln_forward.1} parent=1 // pred_check
      _
    $region39: #{block_adaln_forward.1} parent=1 // pred_check_branch
      %2196 = sbr.rel (0) target = $region41
    $region40: #{block_adaln_forward.1} parent=1 // pred_region
      %s2198 = ssub.s32 256, 256
      %2199 = vsyncadd [#allocation3], %s2198
      %s2200 = sshll.u32 [#allocation2], 4
      %s2201 = int_to_ptr.vmem [resolvable:$true] %s2200
      %2206 = dma.vmem_to_hbm [thread:$0]  %s2201, 256, %s9, [#allocation3], 128, 128, 8
    $region41: #{block_adaln_forward.1} parent=1 // pred_fallthru
      _
    // Predicated region
    $region42: #{block_adaln_forward.1} parent=1 // pred_check
      _
    $region43: #{block_adaln_forward.1} parent=1 // pred_check_branch
      %2208 = sbr.rel (0) target = $region45
    $region44: #{block_adaln_forward.1} parent=1 // pred_region
      %2209 = dma.done [#allocation3], 256
    $region45: #{block_adaln_forward.1} parent=1 // pred_fallthru
      _
    %2210 = vsyncpa [#allocation3], 1

</llo_original>
